<compile_context>
chip_gen: v7x
topology: tpu7x:2x2x1
jax: 0.10.0
libtpu: 0.0.40
codegen_flags: <defaults>
</compile_context>

<pallas_src>
import functools
import math

import jax
import jax.numpy as jnp
from jax.experimental import pallas as pl
from jax.experimental.pallas import tpu as pltpu

# bf16 MXU operands on all current TPUs; accumulation is always f32.
MXU_DTYPE = jnp.bfloat16
# Explicit scoped-VMEM limit (lifts v5e's 16 MiB default, stays <= v7x's 64 MiB physical).
VMEM_LIMIT_BYTES = 64 * 1024 * 1024


# ----------------------------- in-kernel helpers -----------------------------

def _dot(a, b, trans_b=False):
    """2-D matmul on the MXU: bf16 operands, f32 accumulation."""
    a = a.astype(MXU_DTYPE)
    b = b.astype(MXU_DTYPE)
    dn = (((1,), (1,) if trans_b else (0,)), ((), ()))
    return jax.lax.dot_general(a, b, dn, preferred_element_type=jnp.float32)


def _layernorm(z, g, b, eps):
    mean = jnp.mean(z, axis=-1, keepdims=True)
    var = jnp.mean(jnp.square(z - mean), axis=-1, keepdims=True)
    return (z - mean) * jax.lax.rsqrt(var + eps) * g + b


def _mha_core(q, k, v, wo3, *, num_heads, causal):
    """q:(Sq,D), k/v:(Sk,D), wo3:(H,hd,D). Returns attention-out @ W_o, (Sq,D) f32.

    The 1/sqrt(hd) scale is already folded into the Q projection weights.
    The output projection is folded into the head loop (acc += o_h @ wo3[h]) so the
    per-head outputs never leave vregs/VMEM.
    """
    Sq, D = q.shape
    Sk = k.shape[0]
    hd = D // num_heads
    if causal:
        row = jax.lax.broadcasted_iota(jnp.int32, (Sq, Sk), 0)
        col = jax.lax.broadcasted_iota(jnp.int32, (Sq, Sk), 1)
        # additive mask, hoisted out of the head loop (every row has >=1 unmasked key)
        neg = jnp.where(col <= row, 0.0, -jnp.inf)
    acc = jnp.zeros((Sq, D), jnp.float32)
    for h in range(num_heads):                      # small static unroll
        sl = slice(h * hd, (h + 1) * hd)
        s = _dot(q[:, sl], k[:, sl], trans_b=True)  # (Sq, Sk), f32
        if causal:
            s = s + neg
        m = jnp.max(s, axis=-1, keepdims=True)
        p = jnp.exp(s - m)
        denom = jnp.sum(p, axis=-1, keepdims=True)
        # approx reciprocal on the EUP (inference-grade accuracy; bf16 matmuls dominate err)
        p = p * pl.reciprocal(denom, approx=True)
        o_h = _dot(p, v[:, sl])                     # (Sq, hd)
        acc = acc + _dot(o_h, wo3[h])               # fused output projection
    return acc


# ----------------------------- fused kernels -----------------------------

def _self_attn_block_kernel(x_ref, wqkv_ref, bqkv_ref, wo3_ref, bo_ref, g_ref, b_ref,
                            o_ref, *, num_heads, eps):
    x = x_ref[...].astype(jnp.float32)                        # (S, D)
    D = x.shape[-1]
    qkv = _dot(x, wqkv_ref[...]) + bqkv_ref[...]              # single fused QKV matmul
    q, k, v = qkv[:, :D], qkv[:, D:2 * D], qkv[:, 2 * D:]
    attn = _mha_core(q, k, v, wo3_ref[...], num_heads=num_heads, causal=True)
    attn = attn + bo_ref[...]
    o_ref[...] = _layernorm(x + attn, g_ref[...], b_ref[...], eps).astype(o_ref.dtype)


def _cross_attn_block_kernel(x_ref, enc_ref, wq_ref, bq_ref, wkv_ref, bkv_ref,
                             wo3_ref, bo_ref, g_ref, b_ref, o_ref, *, num_heads, eps):
    x = x_ref[...].astype(jnp.float32)                        # (Sq, D)
    enc = enc_ref[...].astype(jnp.float32)                    # (Sk, D)
    D = x.shape[-1]
    q = _dot(x, wq_ref[...]) + bq_ref[...]
    kv = _dot(enc, wkv_ref[...]) + bkv_ref[...]               # fused K/V matmul
    k, v = kv[:, :D], kv[:, D:]
    attn = _mha_core(q, k, v, wo3_ref[...], num_heads=num_heads, causal=False)
    attn = attn + bo_ref[...]
    o_ref[...] = _layernorm(x + attn, g_ref[...], b_ref[...], eps).astype(o_ref.dtype)


def _ffn_addnorm_kernel(x_ref, w1_ref, b1_ref, w2_ref, b2_ref, g_ref, b_ref, o_ref, *, eps):
    x = x_ref[...].astype(jnp.float32)                        # (tm, D)
    h = _dot(x, w1_ref[...]) + b1_ref[...]
    h = jnp.maximum(h, 0.0)
    y = _dot(h, w2_ref[...]) + b2_ref[...]
    o_ref[...] = _layernorm(x + y, g_ref[...], b_ref[...], eps).astype(o_ref.dtype)


# ----------------------------- pallas_call wrappers -----------------------------

def _compiler_params():
    return pltpu.CompilerParams(dimension_semantics=("parallel",),
                                vmem_limit_bytes=VMEM_LIMIT_BYTES)


def self_attn_addnorm(x, p, gamma, beta, *, num_heads, eps=1e-5):
    """LayerNorm(x + MaskedSelfAttn(x)); grid over batch, 'parallel' for megacore."""
    B, S, D = x.shape
    hd = D // num_heads
    kern = functools.partial(_self_attn_block_kernel, num_heads=num_heads, eps=eps)
    ce = pl.CostEstimate(
        flops=int(2 * B * S * (4 * D * D + 2 * S * D)),
        transcendentals=int(B * num_heads * S * S),
        bytes_accessed=int(2 * B * S * D * 4 + 4 * D * D * 2 + 5 * D * 4))
    return pl.pallas_call(
        kern,
        out_shape=jax.ShapeDtypeStruct((B, S, D), x.dtype),
        grid=(B,),
        in_specs=[
            pl.BlockSpec((None, S, D), lambda b: (b, 0, 0)),          # batch dim squeezed
            pl.BlockSpec((D, 3 * D), lambda b: (0, 0)),               # weights resident
            pl.BlockSpec((1, 3 * D), lambda b: (0, 0)),
            pl.BlockSpec((num_heads, hd, D), lambda b: (0, 0, 0)),
            pl.BlockSpec((1, D), lambda b: (0, 0)),
            pl.BlockSpec((1, D), lambda b: (0, 0)),
            pl.BlockSpec((1, D), lambda b: (0, 0)),
        ],
        out_specs=pl.BlockSpec((None, S, D), lambda b: (b, 0, 0)),
        compiler_params=_compiler_params(),
        cost_estimate=ce,
    )(x, p["wqkv"], p["bqkv"], p["wo3"], p["bo"], gamma, beta)


def cross_attn_addnorm(x, enc, p, gamma, beta, *, num_heads, eps=1e-5):
    """LayerNorm(x + EncoderDecoderAttn(x, enc))."""
    B, Sq, D = x.shape
    Sk = enc.shape[1]
    hd = D // num_heads
    kern = functools.partial(_cross_attn_block_kernel, num_heads=num_heads, eps=eps)
    ce = pl.CostEstimate(
        flops=int(2 * B * (Sq * D * D + 2 * Sk * D * D + 2 * Sq * Sk * D + Sq * D * D)),
        transcendentals=int(B * num_heads * Sq * Sk),
        bytes_accessed=int(2 * B * Sq * D * 4 + B * Sk * D * 4 + 4 * D * D * 2 + 5 * D * 4))
    return pl.pallas_call(
        kern,
        out_shape=jax.ShapeDtypeStruct((B, Sq, D), x.dtype),
        grid=(B,),
        in_specs=[
            pl.BlockSpec((None, Sq, D), lambda b: (b, 0, 0)),
            pl.BlockSpec((None, Sk, D), lambda b: (b, 0, 0)),
            pl.BlockSpec((D, D), lambda b: (0, 0)),
            pl.BlockSpec((1, D), lambda b: (0, 0)),
            pl.BlockSpec((D, 2 * D), lambda b: (0, 0)),
            pl.BlockSpec((1, 2 * D), lambda b: (0, 0)),
            pl.BlockSpec((num_heads, hd, D), lambda b: (0, 0, 0)),
            pl.BlockSpec((1, D), lambda b: (0, 0)),
            pl.BlockSpec((1, D), lambda b: (0, 0)),
            pl.BlockSpec((1, D), lambda b: (0, 0)),
        ],
        out_specs=pl.BlockSpec((None, Sq, D), lambda b: (b, 0, 0)),
        compiler_params=_compiler_params(),
        cost_estimate=ce,
    )(x, enc, p["wq"], p["bq"], p["wkv"], p["bkv"], p["wo3"], p["bo"], gamma, beta)


def _pick_tile_m(M):
    """Largest row tile (multiple of 8) that divides M, up to 1024 rows."""
    for t in (1024, 512, 256, 128, 64, 32, 16, 8):
        if M % t == 0:
            return t
    return M   # tiny M: full extent (block == array dim is always legal)


def ffn_addnorm(x2d, w1, b1, w2, b2, gamma, beta, eps=1e-5):
    """LayerNorm(x + Linear2(ReLU(Linear1(x)))); rows (M) tiled, weights resident."""
    M, D = x2d.shape
    H = w1.shape[1]
    tm = _pick_tile_m(M)
    kern = functools.partial(_ffn_addnorm_kernel, eps=eps)
    ce = pl.CostEstimate(
        flops=int(4 * M * D * H),
        transcendentals=int(M),
        bytes_accessed=int(2 * M * D * 4 + 2 * D * H * 2 + (H + 3 * D) * 4))
    return pl.pallas_call(
        kern,
        out_shape=jax.ShapeDtypeStruct((M, D), x2d.dtype),
        grid=(M // tm,),
        in_specs=[
            pl.BlockSpec((tm, D), lambda i: (i, 0)),
            pl.BlockSpec((D, H), lambda i: (0, 0)),
            pl.BlockSpec((1, H), lambda i: (0, 0)),
            pl.BlockSpec((H, D), lambda i: (0, 0)),
            pl.BlockSpec((1, D), lambda i: (0, 0)),
            pl.BlockSpec((1, D), lambda i: (0, 0)),
            pl.BlockSpec((1, D), lambda i: (0, 0)),
        ],
        out_specs=pl.BlockSpec((tm, D), lambda i: (i, 0)),
        compiler_params=_compiler_params(),
        cost_estimate=ce,
    )(x2d, w1, b1, w2, b2, gamma, beta)


def decoder_layer(x, enc_out, kp, *, num_heads):
    B, S, D = x.shape
    x = self_attn_addnorm(x, kp["self_attn"], kp["ln1_g"], kp["ln1_b"], num_heads=num_heads)
    x = cross_attn_addnorm(x, enc_out, kp["cross_attn"], kp["ln2_g"], kp["ln2_b"],
                           num_heads=num_heads)
    x2d = ffn_addnorm(x.reshape(B * S, D), kp["w1"], kp["b1"], kp["w2"], kp["b2"],
                      kp["ln3_g"], kp["ln3_b"])
    return x2d.reshape(B, S, D)


# ----------------------------- host-side param prep -----------------------------

def prepare_kernel_params(params, *, embed_dim, num_heads, mxu_dtype=MXU_DTYPE):
    """One-time host-side prep: fold 1/sqrt(hd) into Q projection, cast matmul weights to
    bf16, reshape biases/LN params to (1, N), reshape W_o to (H, hd, D)."""
    D = embed_dim
    hd = D // num_heads
    scale = 1.0 / math.sqrt(hd)

    def prep_self(p):
        wqkv = p["wqkv"].at[:, :D].multiply(scale)
        bqkv = p["bqkv"].at[:D].multiply(scale)
        return dict(wqkv=wqkv.astype(mxu_dtype),
                    bqkv=bqkv.reshape(1, 3 * D).astype(jnp.float32),
                    wo3=p["wo"].reshape(num_heads, hd, D).astype(mxu_dtype),
                    bo=p["bo"].reshape(1, D).astype(jnp.float32))

    def prep_cross(p):
        wqkv, bqkv = p["wqkv"], p["bqkv"]
        return dict(wq=(wqkv[:, :D] * scale).astype(mxu_dtype),
                    bq=(bqkv[:D] * scale).reshape(1, D).astype(jnp.float32),
                    wkv=wqkv[:, D:].astype(mxu_dtype),
                    bkv=bqkv[D:].reshape(1, 2 * D).astype(jnp.float32),
                    wo3=p["wo"].reshape(num_heads, hd, D).astype(mxu_dtype),
                    bo=p["bo"].reshape(1, D).astype(jnp.float32))

    H = params["w1"].shape[1]
    return dict(
        self_attn=prep_self(params["self_attn"]),
        cross_attn=prep_cross(params["cross_attn"]),
        w1=params["w1"].astype(mxu_dtype), b1=params["b1"].reshape(1, H).astype(jnp.float32),
        w2=params["w2"].astype(mxu_dtype), b2=params["b2"].reshape(1, D).astype(jnp.float32),
        ln1_g=params["ln1_g"].reshape(1, D), ln1_b=params["ln1_b"].reshape(1, D),
        ln2_g=params["ln2_g"].reshape(1, D), ln2_b=params["ln2_b"].reshape(1, D),
        ln3_g=params["ln3_g"].reshape(1, D), ln3_b=params["ln3_b"].reshape(1, D),
    )


# ----------------------------- Pure-JAX f32 reference -----------------------------

def _ref_mha(xq, xkv, p, num_heads, causal):
    B, Sq, D = xq.shape
    Sk = xkv.shape[1]
    hd = D // num_heads
    wqkv, bqkv = p["wqkv"], p["bqkv"]
    q = xq @ wqkv[:, :D] + bqkv[:D]
    k = xkv @ wqkv[:, D:2 * D] + bqkv[D:2 * D]
    v = xkv @ wqkv[:, 2 * D:] + bqkv[2 * D:]
    q = q.reshape(B, Sq, num_heads, hd).transpose(0, 2, 1, 3)
    k = k.reshape(B, Sk, num_heads, hd).transpose(0, 2, 1, 3)
    v = v.reshape(B, Sk, num_heads, hd).transpose(0, 2, 1, 3)
    s = jnp.einsum("bhqd,bhkd->bhqk", q, k) / math.sqrt(hd)
    if causal:
        mask = jnp.tril(jnp.ones((Sq, Sk)))
        s = jnp.where(mask == 0, -jnp.inf, s)
    a = jax.nn.softmax(s, axis=-1)
    o = jnp.einsum("bhqk,bhkd->bhqd", a, v).transpose(0, 2, 1, 3).reshape(B, Sq, D)
    return o @ p["wo"] + p["bo"]


def _ref_ln(z, g, b, eps=1e-5):
    m = jnp.mean(z, axis=-1, keepdims=True)
    v = jnp.mean(jnp.square(z - m), axis=-1, keepdims=True)
    return (z - m) * jax.lax.rsqrt(v + eps) * g + b


def decoder_layer_ref(x, enc_out, params, num_heads):
    x = _ref_ln(x + _ref_mha(x, x, params["self_attn"], num_heads, True),
                params["ln1_g"], params["ln1_b"])
    x = _ref_ln(x + _ref_mha(x, enc_out, params["cross_attn"], num_heads, False),
                params["ln2_g"], params["ln2_b"])
    ff = jnp.maximum(x @ params["w1"] + params["b1"], 0.0) @ params["w2"] + params["b2"]
    x = _ref_ln(x + ff, params["ln3_g"], params["ln3_b"])
    return x


# ----------------------------- Parameter init -----------------------------

def _init_linear(key, fan_in, fan_out):
    kw, kb = jax.random.split(key)
    bound = 1.0 / math.sqrt(fan_in)
    w = jax.random.uniform(kw, (fan_in, fan_out), jnp.float32, -bound, bound)
    b = jax.random.uniform(kb, (fan_out,), jnp.float32, -bound, bound)
    return w, b


def _attn_params(key, embed_dim):
    k1, k2, k3, k4 = jax.random.split(key, 4)
    wq, bq = _init_linear(k1, embed_dim, embed_dim)
    wk, bk = _init_linear(k2, embed_dim, embed_dim)
    wv, bv = _init_linear(k3, embed_dim, embed_dim)
    wo, bo = _init_linear(k4, embed_dim, embed_dim)
    return dict(wqkv=jnp.concatenate([wq, wk, wv], axis=1),
                bqkv=jnp.concatenate([bq, bk, bv], axis=0),
                wo=wo, bo=bo)


def init_params(key, embed_dim, hidden_dim):
    keys = jax.random.split(key, 4)
    w1, b1 = _init_linear(keys[2], embed_dim, hidden_dim)
    w2, b2 = _init_linear(keys[3], hidden_dim, embed_dim)
    ones = jnp.ones((embed_dim,), jnp.float32)
    zeros = jnp.zeros((embed_dim,), jnp.float32)
    return dict(
        self_attn=_attn_params(keys[0], embed_dim),
        cross_attn=_attn_params(keys[1], embed_dim),
        w1=w1, b1=b1, w2=w2, b2=b2,
        ln1_g=ones, ln1_b=zeros, ln2_g=ones, ln2_b=zeros, ln3_g=ones, ln3_b=zeros,
    )


# ----------------------------- Main -----------------------------

if __name__ == "__main__":
    B, S, ENC_S = 2, 8, 12
    EMBED, HEADS, HIDDEN = 32, 4, 64

    root = jax.random.PRNGKey(0)
    kx, kenc, kp = jax.random.split(root, 3)
    x = jax.random.normal(kx, (B, S, EMBED), jnp.float32)
    enc_out = jax.random.normal(kenc, (B, ENC_S, EMBED), jnp.float32)
    params = init_params(kp, EMBED, HIDDEN)
    kparams = prepare_kernel_params(params, embed_dim=EMBED, num_heads=HEADS)

    out = jax.block_until_ready(decoder_layer(x, enc_out, kparams, num_heads=HEADS))

    ref = decoder_layer_ref(x, enc_out, params, HEADS)
    max_err = float(jnp.max(jnp.abs(out - ref)))
    assert out.shape == (B, S, EMBED)
    # bf16 MXU operands (f32 accumulation) + approx reciprocal: loosened tolerance.
    assert max_err < 1e-1, f"mismatch vs reference: {max_err}"

    print("KERNEL_OK")
</pallas_src>

<mosaic_0001>
module attributes {stable_mosaic.version = 11 : i64} {
  func.func @_self_attn_block_kernel(%arg0: i32, %arg1: memref<1x8x32xf32, #tpu.memory_space<vmem>>, %arg2: memref<32x96xbf16, #tpu.memory_space<vmem>>, %arg3: memref<1x96xf32, #tpu.memory_space<vmem>>, %arg4: memref<4x8x32xbf16, #tpu.memory_space<vmem>>, %arg5: memref<1x32xf32, #tpu.memory_space<vmem>>, %arg6: memref<1x32xf32, #tpu.memory_space<vmem>>, %arg7: memref<1x32xf32, #tpu.memory_space<vmem>>, %arg8: memref<1x8x32xf32, #tpu.memory_space<vmem>>) attributes {dimension_semantics = [#tpu.dimension_semantics<parallel>], iteration_bounds = array<i64: 2>, scalar_prefetch = 0 : i64, scratch_operands = 0 : i64, tpu.core_type = #tpu.core_type<tc>, window_params = [{transform_indices = @transform_0, window_bounds = array<i64: 1, 8, 32>}, {pipeline_mode = #tpu.pipeline_mode<synchronous>, transform_indices = @transform_1, window_bounds = array<i64: 32, 96>}, {pipeline_mode = #tpu.pipeline_mode<synchronous>, transform_indices = @transform_2, window_bounds = array<i64: 1, 96>}, {pipeline_mode = #tpu.pipeline_mode<synchronous>, transform_indices = @transform_3, window_bounds = array<i64: 4, 8, 32>}, {pipeline_mode = #tpu.pipeline_mode<synchronous>, transform_indices = @transform_4, window_bounds = array<i64: 1, 32>}, {pipeline_mode = #tpu.pipeline_mode<synchronous>, transform_indices = @transform_5, window_bounds = array<i64: 1, 32>}, {pipeline_mode = #tpu.pipeline_mode<synchronous>, transform_indices = @transform_6, window_bounds = array<i64: 1, 32>}, {transform_indices = @transform_7, window_bounds = array<i64: 1, 8, 32>}]} {
    %c0 = arith.constant 0 : index
    %c0_0 = arith.constant 0 : index
    %c0_1 = arith.constant 0 : index
    %0 = vector.load %arg1[%c0, %c0_0, %c0_1] : memref<1x8x32xf32, #tpu.memory_space<vmem>>, vector<1x8x32xf32>
    %1 = vector.shape_cast %0 : vector<1x8x32xf32> to vector<8x32xf32>
    %c0_2 = arith.constant 0 : index
    %c0_3 = arith.constant 0 : index
    %2 = vector.load %arg2[%c0_2, %c0_3] : memref<32x96xbf16, #tpu.memory_space<vmem>>, vector<32x96xbf16>
    %3 = arith.truncf %1 : vector<8x32xf32> to vector<8x32xbf16>
    %cst = arith.constant dense<0.000000e+00> : vector<8x96xf32>
    %4 = tpu.matmul %3, %2, %cst {dimension_numbers = #tpu.dot_dimension_numbers<[1], [0], [0], [1], [0, 0, 1, 1], [], []>} : vector<8x32xbf16>, vector<32x96xbf16>, vector<8x96xf32> -> vector<8x96xf32>
    %c0_4 = arith.constant 0 : index
    %c0_5 = arith.constant 0 : index
    %5 = vector.load %arg3[%c0_4, %c0_5] : memref<1x96xf32, #tpu.memory_space<vmem>>, vector<1x96xf32>
    %6 = vector.broadcast %5 : vector<1x96xf32> to vector<8x96xf32>
    %7 = arith.addf %4, %6 : vector<8x96xf32>
    %8 = vector.extract_strided_slice %7 {offsets = [0, 0], sizes = [8, 32], strides = [1, 1]} : vector<8x96xf32> to vector<8x32xf32>
    %9 = vector.extract_strided_slice %7 {offsets = [0, 32], sizes = [8, 32], strides = [1, 1]} : vector<8x96xf32> to vector<8x32xf32>
    %10 = vector.extract_strided_slice %7 {offsets = [0, 64], sizes = [8, 32], strides = [1, 1]} : vector<8x96xf32> to vector<8x32xf32>
    %c0_6 = arith.constant 0 : index
    %c0_7 = arith.constant 0 : index
    %c0_8 = arith.constant 0 : index
    %11 = vector.load %arg4[%c0_6, %c0_7, %c0_8] : memref<4x8x32xbf16, #tpu.memory_space<vmem>>, vector<4x8x32xbf16>
    %12 = tpu.iota {dimensions = array<i32: 0>} : vector<8x8xi32>
    %13 = tpu.iota {dimensions = array<i32: 1>} : vector<8x8xi32>
    %14 = arith.cmpi sle, %13, %12 : vector<8x8xi32>
    %cst_9 = arith.constant 0.000000e+00 : f32
    %cst_10 = arith.constant 0xFF800000 : f32
    %15 = vector.broadcast %cst_9 : f32 to vector<8x8xf32>
    %16 = vector.broadcast %cst_10 : f32 to vector<8x8xf32>
    %17 = arith.select %14, %15, %16 : vector<8x8xi1>, vector<8x8xf32>
    %cst_11 = arith.constant 0.000000e+00 : f32
    %18 = vector.broadcast %cst_11 : f32 to vector<8x32xf32>
    %19 = vector.extract_strided_slice %8 {offsets = [0, 0], sizes = [8, 8], strides = [1, 1]} : vector<8x32xf32> to vector<8x8xf32>
    %20 = vector.extract_strided_slice %9 {offsets = [0, 0], sizes = [8, 8], strides = [1, 1]} : vector<8x32xf32> to vector<8x8xf32>
    %21 = arith.truncf %19 : vector<8x8xf32> to vector<8x8xbf16>
    %22 = arith.truncf %20 : vector<8x8xf32> to vector<8x8xbf16>
    %cst_12 = arith.constant dense<0.000000e+00> : vector<8x8xf32>
    %23 = tpu.matmul %21, %22, %cst_12 {dimension_numbers = #tpu.dot_dimension_numbers<[1], [1], [0], [0], [0, 0, 1, 0], [], []>} : vector<8x8xbf16>, vector<8x8xbf16>, vector<8x8xf32> -> vector<8x8xf32>
    %24 = arith.addf %23, %17 : vector<8x8xf32>
    %cst_13 = arith.constant dense<0xFF800000> : vector<8xf32>
    %25 = vector.multi_reduction <maximumf>, %24, %cst_13 [1] : vector<8x8xf32> to vector<8xf32>
    %26 = vector.shape_cast %25 : vector<8xf32> to vector<8x1xf32>
    %27 = vector.broadcast %26 : vector<8x1xf32> to vector<8x8xf32>
    %28 = arith.subf %24, %27 : vector<8x8xf32>
    %29 = math.exp %28 : vector<8x8xf32>
    %cst_14 = arith.constant dense<0.000000e+00> : vector<8xf32>
    %30 = vector.multi_reduction <add>, %29, %cst_14 [1] : vector<8x8xf32> to vector<8xf32>
    %31 = vector.shape_cast %30 : vector<8xf32> to vector<8x1xf32>
    %32 = tpu.reciprocal %31 {approx = true} : vector<8x1xf32> -> vector<8x1xf32>
    %33 = vector.broadcast %32 : vector<8x1xf32> to vector<8x8xf32>
    %34 = arith.mulf %29, %33 : vector<8x8xf32>
    %35 = vector.extract_strided_slice %10 {offsets = [0, 0], sizes = [8, 8], strides = [1, 1]} : vector<8x32xf32> to vector<8x8xf32>
    %36 = arith.truncf %34 : vector<8x8xf32> to vector<8x8xbf16>
    %37 = arith.truncf %35 : vector<8x8xf32> to vector<8x8xbf16>
    %cst_15 = arith.constant dense<0.000000e+00> : vector<8x8xf32>
    %38 = tpu.matmul %36, %37, %cst_15 {dimension_numbers = #tpu.dot_dimension_numbers<[1], [0], [0], [1], [0, 0, 1, 1], [], []>} : vector<8x8xbf16>, vector<8x8xbf16>, vector<8x8xf32> -> vector<8x8xf32>
    %39 = vector.extract_strided_slice %11 {offsets = [0, 0, 0], sizes = [1, 8, 32], strides = [1, 1, 1]} : vector<4x8x32xbf16> to vector<1x8x32xbf16>
    %40 = vector.shape_cast %39 : vector<1x8x32xbf16> to vector<8x32xbf16>
    %41 = arith.truncf %38 : vector<8x8xf32> to vector<8x8xbf16>
    %cst_16 = arith.constant dense<0.000000e+00> : vector<8x32xf32>
    %42 = tpu.matmul %41, %40, %cst_16 {dimension_numbers = #tpu.dot_dimension_numbers<[1], [0], [0], [1], [0, 0, 1, 1], [], []>} : vector<8x8xbf16>, vector<8x32xbf16>, vector<8x32xf32> -> vector<8x32xf32>
    %43 = arith.addf %18, %42 : vector<8x32xf32>
    %44 = vector.extract_strided_slice %8 {offsets = [0, 8], sizes = [8, 8], strides = [1, 1]} : vector<8x32xf32> to vector<8x8xf32>
    %45 = vector.extract_strided_slice %9 {offsets = [0, 8], sizes = [8, 8], strides = [1, 1]} : vector<8x32xf32> to vector<8x8xf32>
    %46 = arith.truncf %44 : vector<8x8xf32> to vector<8x8xbf16>
    %47 = arith.truncf %45 : vector<8x8xf32> to vector<8x8xbf16>
    %cst_17 = arith.constant dense<0.000000e+00> : vector<8x8xf32>
    %48 = tpu.matmul %46, %47, %cst_17 {dimension_numbers = #tpu.dot_dimension_numbers<[1], [1], [0], [0], [0, 0, 1, 0], [], []>} : vector<8x8xbf16>, vector<8x8xbf16>, vector<8x8xf32> -> vector<8x8xf32>
    %49 = arith.addf %48, %17 : vector<8x8xf32>
    %cst_18 = arith.constant dense<0xFF800000> : vector<8xf32>
    %50 = vector.multi_reduction <maximumf>, %49, %cst_18 [1] : vector<8x8xf32> to vector<8xf32>
    %51 = vector.shape_cast %50 : vector<8xf32> to vector<8x1xf32>
    %52 = vector.broadcast %51 : vector<8x1xf32> to vector<8x8xf32>
    %53 = arith.subf %49, %52 : vector<8x8xf32>
    %54 = math.exp %53 : vector<8x8xf32>
    %cst_19 = arith.constant dense<0.000000e+00> : vector<8xf32>
    %55 = vector.multi_reduction <add>, %54, %cst_19 [1] : vector<8x8xf32> to vector<8xf32>
    %56 = vector.shape_cast %55 : vector<8xf32> to vector<8x1xf32>
    %57 = tpu.reciprocal %56 {approx = true} : vector<8x1xf32> -> vector<8x1xf32>
    %58 = vector.broadcast %57 : vector<8x1xf32> to vector<8x8xf32>
    %59 = arith.mulf %54, %58 : vector<8x8xf32>
    %60 = vector.extract_strided_slice %10 {offsets = [0, 8], sizes = [8, 8], strides = [1, 1]} : vector<8x32xf32> to vector<8x8xf32>
    %61 = arith.truncf %59 : vector<8x8xf32> to vector<8x8xbf16>
    %62 = arith.truncf %60 : vector<8x8xf32> to vector<8x8xbf16>
    %cst_20 = arith.constant dense<0.000000e+00> : vector<8x8xf32>
    %63 = tpu.matmul %61, %62, %cst_20 {dimension_numbers = #tpu.dot_dimension_numbers<[1], [0], [0], [1], [0, 0, 1, 1], [], []>} : vector<8x8xbf16>, vector<8x8xbf16>, vector<8x8xf32> -> vector<8x8xf32>
    %64 = vector.extract_strided_slice %11 {offsets = [1, 0, 0], sizes = [1, 8, 32], strides = [1, 1, 1]} : vector<4x8x32xbf16> to vector<1x8x32xbf16>
    %65 = vector.shape_cast %64 : vector<1x8x32xbf16> to vector<8x32xbf16>
    %66 = arith.truncf %63 : vector<8x8xf32> to vector<8x8xbf16>
    %cst_21 = arith.constant dense<0.000000e+00> : vector<8x32xf32>
    %67 = tpu.matmul %66, %65, %cst_21 {dimension_numbers = #tpu.dot_dimension_numbers<[1], [0], [0], [1], [0, 0, 1, 1], [], []>} : vector<8x8xbf16>, vector<8x32xbf16>, vector<8x32xf32> -> vector<8x32xf32>
    %68 = arith.addf %43, %67 : vector<8x32xf32>
    %69 = vector.extract_strided_slice %8 {offsets = [0, 16], sizes = [8, 8], strides = [1, 1]} : vector<8x32xf32> to vector<8x8xf32>
    %70 = vector.extract_strided_slice %9 {offsets = [0, 16], sizes = [8, 8], strides = [1, 1]} : vector<8x32xf32> to vector<8x8xf32>
    %71 = arith.truncf %69 : vector<8x8xf32> to vector<8x8xbf16>
    %72 = arith.truncf %70 : vector<8x8xf32> to vector<8x8xbf16>
    %cst_22 = arith.constant dense<0.000000e+00> : vector<8x8xf32>
    %73 = tpu.matmul %71, %72, %cst_22 {dimension_numbers = #tpu.dot_dimension_numbers<[1], [1], [0], [0], [0, 0, 1, 0], [], []>} : vector<8x8xbf16>, vector<8x8xbf16>, vector<8x8xf32> -> vector<8x8xf32>
    %74 = arith.addf %73, %17 : vector<8x8xf32>
    %cst_23 = arith.constant dense<0xFF800000> : vector<8xf32>
    %75 = vector.multi_reduction <maximumf>, %74, %cst_23 [1] : vector<8x8xf32> to vector<8xf32>
    %76 = vector.shape_cast %75 : vector<8xf32> to vector<8x1xf32>
    %77 = vector.broadcast %76 : vector<8x1xf32> to vector<8x8xf32>
    %78 = arith.subf %74, %77 : vector<8x8xf32>
    %79 = math.exp %78 : vector<8x8xf32>
    %cst_24 = arith.constant dense<0.000000e+00> : vector<8xf32>
    %80 = vector.multi_reduction <add>, %79, %cst_24 [1] : vector<8x8xf32> to vector<8xf32>
    %81 = vector.shape_cast %80 : vector<8xf32> to vector<8x1xf32>
    %82 = tpu.reciprocal %81 {approx = true} : vector<8x1xf32> -> vector<8x1xf32>
    %83 = vector.broadcast %82 : vector<8x1xf32> to vector<8x8xf32>
    %84 = arith.mulf %79, %83 : vector<8x8xf32>
    %85 = vector.extract_strided_slice %10 {offsets = [0, 16], sizes = [8, 8], strides = [1, 1]} : vector<8x32xf32> to vector<8x8xf32>
    %86 = arith.truncf %84 : vector<8x8xf32> to vector<8x8xbf16>
    %87 = arith.truncf %85 : vector<8x8xf32> to vector<8x8xbf16>
    %cst_25 = arith.constant dense<0.000000e+00> : vector<8x8xf32>
    %88 = tpu.matmul %86, %87, %cst_25 {dimension_numbers = #tpu.dot_dimension_numbers<[1], [0], [0], [1], [0, 0, 1, 1], [], []>} : vector<8x8xbf16>, vector<8x8xbf16>, vector<8x8xf32> -> vector<8x8xf32>
    %89 = vector.extract_strided_slice %11 {offsets = [2, 0, 0], sizes = [1, 8, 32], strides = [1, 1, 1]} : vector<4x8x32xbf16> to vector<1x8x32xbf16>
    %90 = vector.shape_cast %89 : vector<1x8x32xbf16> to vector<8x32xbf16>
    %91 = arith.truncf %88 : vector<8x8xf32> to vector<8x8xbf16>
    %cst_26 = arith.constant dense<0.000000e+00> : vector<8x32xf32>
    %92 = tpu.matmul %91, %90, %cst_26 {dimension_numbers = #tpu.dot_dimension_numbers<[1], [0], [0], [1], [0, 0, 1, 1], [], []>} : vector<8x8xbf16>, vector<8x32xbf16>, vector<8x32xf32> -> vector<8x32xf32>
    %93 = arith.addf %68, %92 : vector<8x32xf32>
    %94 = vector.extract_strided_slice %8 {offsets = [0, 24], sizes = [8, 8], strides = [1, 1]} : vector<8x32xf32> to vector<8x8xf32>
    %95 = vector.extract_strided_slice %9 {offsets = [0, 24], sizes = [8, 8], strides = [1, 1]} : vector<8x32xf32> to vector<8x8xf32>
    %96 = arith.truncf %94 : vector<8x8xf32> to vector<8x8xbf16>
    %97 = arith.truncf %95 : vector<8x8xf32> to vector<8x8xbf16>
    %cst_27 = arith.constant dense<0.000000e+00> : vector<8x8xf32>
    %98 = tpu.matmul %96, %97, %cst_27 {dimension_numbers = #tpu.dot_dimension_numbers<[1], [1], [0], [0], [0, 0, 1, 0], [], []>} : vector<8x8xbf16>, vector<8x8xbf16>, vector<8x8xf32> -> vector<8x8xf32>
    %99 = arith.addf %98, %17 : vector<8x8xf32>
    %cst_28 = arith.constant dense<0xFF800000> : vector<8xf32>
    %100 = vector.multi_reduction <maximumf>, %99, %cst_28 [1] : vector<8x8xf32> to vector<8xf32>
    %101 = vector.shape_cast %100 : vector<8xf32> to vector<8x1xf32>
    %102 = vector.broadcast %101 : vector<8x1xf32> to vector<8x8xf32>
    %103 = arith.subf %99, %102 : vector<8x8xf32>
    %104 = math.exp %103 : vector<8x8xf32>
    %cst_29 = arith.constant dense<0.000000e+00> : vector<8xf32>
    %105 = vector.multi_reduction <add>, %104, %cst_29 [1] : vector<8x8xf32> to vector<8xf32>
    %106 = vector.shape_cast %105 : vector<8xf32> to vector<8x1xf32>
    %107 = tpu.reciprocal %106 {approx = true} : vector<8x1xf32> -> vector<8x1xf32>
    %108 = vector.broadcast %107 : vector<8x1xf32> to vector<8x8xf32>
    %109 = arith.mulf %104, %108 : vector<8x8xf32>
    %110 = vector.extract_strided_slice %10 {offsets = [0, 24], sizes = [8, 8], strides = [1, 1]} : vector<8x32xf32> to vector<8x8xf32>
    %111 = arith.truncf %109 : vector<8x8xf32> to vector<8x8xbf16>
    %112 = arith.truncf %110 : vector<8x8xf32> to vector<8x8xbf16>
    %cst_30 = arith.constant dense<0.000000e+00> : vector<8x8xf32>
    %113 = tpu.matmul %111, %112, %cst_30 {dimension_numbers = #tpu.dot_dimension_numbers<[1], [0], [0], [1], [0, 0, 1, 1], [], []>} : vector<8x8xbf16>, vector<8x8xbf16>, vector<8x8xf32> -> vector<8x8xf32>
    %114 = vector.extract_strided_slice %11 {offsets = [3, 0, 0], sizes = [1, 8, 32], strides = [1, 1, 1]} : vector<4x8x32xbf16> to vector<1x8x32xbf16>
    %115 = vector.shape_cast %114 : vector<1x8x32xbf16> to vector<8x32xbf16>
    %116 = arith.truncf %113 : vector<8x8xf32> to vector<8x8xbf16>
    %cst_31 = arith.constant dense<0.000000e+00> : vector<8x32xf32>
    %117 = tpu.matmul %116, %115, %cst_31 {dimension_numbers = #tpu.dot_dimension_numbers<[1], [0], [0], [1], [0, 0, 1, 1], [], []>} : vector<8x8xbf16>, vector<8x32xbf16>, vector<8x32xf32> -> vector<8x32xf32>
    %118 = arith.addf %93, %117 : vector<8x32xf32>
    %c0_32 = arith.constant 0 : index
    %c0_33 = arith.constant 0 : index
    %119 = vector.load %arg5[%c0_32, %c0_33] : memref<1x32xf32, #tpu.memory_space<vmem>>, vector<1x32xf32>
    %120 = vector.broadcast %119 : vector<1x32xf32> to vector<8x32xf32>
    %121 = arith.addf %118, %120 : vector<8x32xf32>
    %122 = arith.addf %1, %121 : vector<8x32xf32>
    %c0_34 = arith.constant 0 : index
    %c0_35 = arith.constant 0 : index
    %123 = vector.load %arg6[%c0_34, %c0_35] : memref<1x32xf32, #tpu.memory_space<vmem>>, vector<1x32xf32>
    %c0_36 = arith.constant 0 : index
    %c0_37 = arith.constant 0 : index
    %124 = vector.load %arg7[%c0_36, %c0_37] : memref<1x32xf32, #tpu.memory_space<vmem>>, vector<1x32xf32>
    %cst_38 = arith.constant dense<0.000000e+00> : vector<8xf32>
    %125 = vector.multi_reduction <add>, %122, %cst_38 [1] : vector<8x32xf32> to vector<8xf32>
    %126 = vector.shape_cast %125 : vector<8xf32> to vector<8x1xf32>
    %cst_39 = arith.constant 3.200000e+01 : f32
    %127 = vector.broadcast %cst_39 : f32 to vector<8x1xf32>
    %128 = arith.divf %126, %127 : vector<8x1xf32>
    %129 = vector.broadcast %128 : vector<8x1xf32> to vector<8x32xf32>
    %130 = arith.subf %122, %129 : vector<8x32xf32>
    %131 = arith.mulf %130, %130 : vector<8x32xf32>
    %cst_40 = arith.constant dense<0.000000e+00> : vector<8xf32>
    %132 = vector.multi_reduction <add>, %131, %cst_40 [1] : vector<8x32xf32> to vector<8xf32>
    %133 = vector.shape_cast %132 : vector<8xf32> to vector<8x1xf32>
    %cst_41 = arith.constant 3.200000e+01 : f32
    %134 = vector.broadcast %cst_41 : f32 to vector<8x1xf32>
    %135 = arith.divf %133, %134 : vector<8x1xf32>
    %136 = vector.broadcast %128 : vector<8x1xf32> to vector<8x32xf32>
    %137 = arith.subf %122, %136 : vector<8x32xf32>
    %cst_42 = arith.constant 9.99999974E-6 : f32
    %138 = vector.broadcast %cst_42 : f32 to vector<8x1xf32>
    %139 = arith.addf %135, %138 : vector<8x1xf32>
    %140 = math.rsqrt %139 : vector<8x1xf32>
    %141 = vector.broadcast %140 : vector<8x1xf32> to vector<8x32xf32>
    %142 = arith.mulf %137, %141 : vector<8x32xf32>
    %143 = vector.broadcast %123 : vector<1x32xf32> to vector<8x32xf32>
    %144 = arith.mulf %142, %143 : vector<8x32xf32>
    %145 = vector.broadcast %124 : vector<1x32xf32> to vector<8x32xf32>
    %146 = arith.addf %144, %145 : vector<8x32xf32>
    %c0_43 = arith.constant 0 : index
    %c0_44 = arith.constant 0 : index
    %c0_45 = arith.constant 0 : index
    %147 = vector.load %arg8[%c0_43, %c0_44, %c0_45] : memref<1x8x32xf32, #tpu.memory_space<vmem>>, vector<1x8x32xf32>
    %148 = vector.shape_cast %147 : vector<1x8x32xf32> to vector<8x32xf32>
    %149 = vector.shape_cast %146 : vector<8x32xf32> to vector<1x8x32xf32>
    tpu.vector_store %arg8[%c0_43, %c0_44, %c0_45], %149 {strides = array<i32>} : memref<1x8x32xf32, #tpu.memory_space<vmem>>, vector<1x8x32xf32>,
    return
  }
  func.func @transform_0(%arg0: i32) -> (i32, i32, i32) {
    %c0_i32 = arith.constant 0 : i32
    %c0_i32_0 = arith.constant 0 : i32
    %c0_i32_1 = arith.constant 0 : i32
    return %arg0, %c0_i32, %c0_i32_0 : i32, i32, i32
  }
  func.func @transform_1(%arg0: i32) -> (i32, i32) {
    %c0_i32 = arith.constant 0 : i32
    %c0_i32_0 = arith.constant 0 : i32
    %c0_i32_1 = arith.constant 0 : i32
    return %c0_i32, %c0_i32_0 : i32, i32
  }
  func.func @transform_2(%arg0: i32) -> (i32, i32) {
    %c0_i32 = arith.constant 0 : i32
    %c0_i32_0 = arith.constant 0 : i32
    %c0_i32_1 = arith.constant 0 : i32
    return %c0_i32, %c0_i32_0 : i32, i32
  }
  func.func @transform_3(%arg0: i32) -> (i32, i32, i32) {
    %c0_i32 = arith.constant 0 : i32
    %c0_i32_0 = arith.constant 0 : i32
    %c0_i32_1 = arith.constant 0 : i32
    %c0_i32_2 = arith.constant 0 : i32
    return %c0_i32, %c0_i32_0, %c0_i32_1 : i32, i32, i32
  }
  func.func @transform_4(%arg0: i32) -> (i32, i32) {
    %c0_i32 = arith.constant 0 : i32
    %c0_i32_0 = arith.constant 0 : i32
    %c0_i32_1 = arith.constant 0 : i32
    return %c0_i32, %c0_i32_0 : i32, i32
  }
  func.func @transform_5(%arg0: i32) -> (i32, i32) {
    %c0_i32 = arith.constant 0 : i32
    %c0_i32_0 = arith.constant 0 : i32
    %c0_i32_1 = arith.constant 0 : i32
    return %c0_i32, %c0_i32_0 : i32, i32
  }
  func.func @transform_6(%arg0: i32) -> (i32, i32) {
    %c0_i32 = arith.constant 0 : i32
    %c0_i32_0 = arith.constant 0 : i32
    %c0_i32_1 = arith.constant 0 : i32
    return %c0_i32, %c0_i32_0 : i32, i32
  }
  func.func @transform_7(%arg0: i32) -> (i32, i32, i32) {
    %c0_i32 = arith.constant 0 : i32
    %c0_i32_0 = arith.constant 0 : i32
    %c0_i32_1 = arith.constant 0 : i32
    return %arg0, %c0_i32, %c0_i32_0 : i32, i32, i32
  }
}

</mosaic_0001>

<llo_original>
// kernel: tpu_custom_call.1
$region0: #{tpu_custom_call.1}
  #allocation0 [shape = 'u32[]', space=smem, size = 0x4, offset = 0x4, fixed_abs, tag = 'smem constant byte address 0x4 - core index']
  #allocation1 [shape = 'u32[144,128]{1,0:T(1,128)}', space=vmem, size = 0x12000, scoped, tag = 'internal scratch']
  %s0 = inlined_call_operand.hbm [shape: f32[2,8,32], index: 0, kind: input, shape index: {}]
  %s1 = inlined_call_operand.hbm [shape: bf16[32,96], index: 1, kind: input, shape index: {}]
  %s2 = inlined_call_operand.hbm [shape: f32[1,96], index: 2, kind: input, shape index: {}]
  %s3 = inlined_call_operand.hbm [shape: bf16[4,8,32], index: 3, kind: input, shape index: {}]
  %s4 = inlined_call_operand.hbm [shape: f32[1,32], index: 4, kind: input, shape index: {}]
  %s5 = inlined_call_operand.hbm [shape: f32[1,32], index: 5, kind: input, shape index: {}]
  %s6 = inlined_call_operand.hbm [shape: f32[1,32], index: 6, kind: input, shape index: {}]
  %s7 = inlined_call_operand.hbm [shape: f32[2,8,32], index: 7, kind: output, shape index: {}]
  %s8 = sld [smem:[#allocation0]]
  $region89: #{tpu_custom_call.1} parent=0
    _
  %s10 = ssub.s32 1, %s8
  %s11 = scalar_select 0, %s10, %s8
  $region1: #{tpu_custom_call.1} parent=0
    #allocation2 [shape = 'u8[8192]{0}', space=vmem, size = 0x2000, scoped, tag = 'input window, operand 0']
    #allocation3 [shape = 's32[2]{0}', space=sflag, size = 0x8, scoped, tag = 'scoped memory for tpu_custom_call.1']
    #allocation4 [shape = 's32[2]{0}', space=sflag, size = 0x8, scoped, tag = 'scoped memory for tpu_custom_call.1']
    #allocation5 [shape = 'u8[8192]{0}', space=vmem, size = 0x2000, scoped, tag = 'input window, operand 1, single buffered']
    #allocation6 [shape = 's32[1]{0}', space=sflag, size = 0x4, scoped, tag = 'scoped memory for tpu_custom_call.1']
    #allocation7 [shape = 'u8[512]{0}', space=vmem, size = 0x400, scoped, tag = 'input window, operand 2, single buffered']
    #allocation8 [shape = 'u8[8192]{0}', space=vmem, size = 0x2000, scoped, tag = 'input window, operand 3, single buffered']
    #allocation9 [shape = 's32[1]{0}', space=sflag, size = 0x4, scoped, tag = 'scoped memory for tpu_custom_call.1']
    #allocation10 [shape = 'u8[512]{0}', space=vmem, size = 0x400, scoped, tag = 'input window, operand 4, single buffered']
    #allocation11 [shape = 'u8[512]{0}', space=vmem, size = 0x400, scoped, tag = 'input window, operand 5, single buffered']
    #allocation12 [shape = 's32[1]{0}', space=sflag, size = 0x4, scoped, tag = 'scoped memory for tpu_custom_call.1']
    #allocation13 [shape = 'u8[512]{0}', space=vmem, size = 0x400, scoped, tag = 'input window, operand 6, single buffered']
    #allocation14 [shape = 'u8[8192]{0}', space=vmem, size = 0x2000, scoped, tag = 'output window, operand 0']
    %12 = vsyncpa [#allocation3], 0
    %s13 = scalar_lea.sflag [#allocation3], 1
    %14 = vsyncpa %s13, 0
    %15 = vsyncpa [#allocation6], 0
    %16 = vsyncpa [#allocation9], 0
    %17 = vsyncpa [#allocation12], 0
    %18 = vsyncpa [#allocation4], 0
    %s19 = scalar_lea.sflag [#allocation4], 1
    %20 = vsyncpa %s19, 0
    loop: start=0, step=1, limit=4
    $region2: #{tpu_custom_call.1} parent=1 // loop_pre_header
      _
    $region3: #{tpu_custom_call.1} parent=1 // loop_header
      %s22 = sphi 0, %s26
      %p23 = scmp.ge.s32.totalorder %s22, 4
      %s32 = sphi 0, %s34
      %s35 = sphi 0, %s32
      %s36 = sphi 0, %s35
      %s52 = sphi 0, %s36
      %s56 = sphi 0, %s56
      %s58 = sphi 0, %s56
      %s59 = sphi 0, %s58
      %s73 = sphi 0, %s59
      %s77 = sphi 0, %s77
      %s79 = sphi 0, %s77
      %s80 = sphi 0, %s79
      %s94 = sphi 0, %s80
      %s98 = sphi 0, %s98
      %s100 = sphi 0, %s98
      %s101 = sphi 0, %s100
      %s115 = sphi 0, %s101
      %s119 = sphi 0, %s119
      %s121 = sphi 0, %s119
      %s122 = sphi 0, %s121
      %s136 = sphi 0, %s122
      %s140 = sphi 0, %s140
      %s142 = sphi 0, %s140
      %s143 = sphi 0, %s142
      %s157 = sphi 0, %s143
      %s161 = sphi 0, %s161
      %s163 = sphi 0, %s161
      %s164 = sphi 0, %s163
      %s178 = sphi 0, %s164
      %s184 = sphi 0, %s186
      %s187 = sphi 0, %s184
      %s188 = sphi 0, %s187
      %s204 = sphi 0, %s188
    $region4: #{tpu_custom_call.1} parent=1 // loop_header_branch
      %25 = sbr.rel (%p23) target = $region8
    $region5: #{tpu_custom_call.1} parent=1 // loop_body
      %s27 = ssub.s32 %s22, 1
      %s28 = ssub.s32 %s22, 2
      %s29 = sadd.s32 %s22, 1
      %s30 = ssub.s32 %s22, %s29
      %p31 = scmp.eq.s32.totalorder %s30, 0
      %s33 = sadd.s32 %s32, 1
      %s34 = scalar_select %p31, %s32, %s33
      %p37 = pneg %p31
      %p38 = scmp.eq.s32.totalorder %s22, 1
      %p39 = por %p37, %p38
      %p40 = scmp.ne.s32.totalorder %s32, %s35
      %p41 = scmp.eq.s32.totalorder %s22, 0
      %p42 = por %p40, %p41
      %p43 = scmp.ne.s32.totalorder %s32, %s35
      %p44 = scmp.eq.s32.totalorder %s27, 1
      %p45 = por %p43, %p44
      %p46 = scmp.ne.s32.totalorder %s35, %s36
      %p47 = scmp.eq.s32.totalorder %s27, 0
      %p48 = por %p46, %p47
      %p49 = scmp.ne.s32.totalorder %s35, %s36
      %p50 = scmp.eq.s32.totalorder %s28, 1
      %p51 = por %p49, %p50
      %p53 = scmp.ne.s32.totalorder %s36, %s52
      %p54 = scmp.eq.s32.totalorder %s28, 0
      %p55 = por %p53, %p54
      %s57 = sadd.s32 %s56, 1
      %p60 = scmp.eq.s32.totalorder %s22, 1
      %p61 = scmp.ne.s32.totalorder %s56, %s58
      %p62 = scmp.eq.s32.totalorder %s22, 0
      %p63 = por %p61, %p62
      %p64 = scmp.ne.s32.totalorder %s56, %s58
      %p65 = scmp.eq.s32.totalorder %s27, 1
      %p66 = por %p64, %p65
      %p67 = scmp.ne.s32.totalorder %s58, %s59
      %p68 = scmp.eq.s32.totalorder %s27, 0
      %p69 = por %p67, %p68
      %p70 = scmp.ne.s32.totalorder %s58, %s59
      %p71 = scmp.eq.s32.totalorder %s28, 1
      %p72 = por %p70, %p71
      %p74 = scmp.ne.s32.totalorder %s59, %s73
      %p75 = scmp.eq.s32.totalorder %s28, 0
      %p76 = por %p74, %p75
      %s78 = sadd.s32 %s77, 1
      %p81 = scmp.eq.s32.totalorder %s22, 1
      %p82 = scmp.ne.s32.totalorder %s77, %s79
      %p83 = scmp.eq.s32.totalorder %s22, 0
      %p84 = por %p82, %p83
      %p85 = scmp.ne.s32.totalorder %s77, %s79
      %p86 = scmp.eq.s32.totalorder %s27, 1
      %p87 = por %p85, %p86
      %p88 = scmp.ne.s32.totalorder %s79, %s80
      %p89 = scmp.eq.s32.totalorder %s27, 0
      %p90 = por %p88, %p89
      %p91 = scmp.ne.s32.totalorder %s79, %s80
      %p92 = scmp.eq.s32.totalorder %s28, 1
      %p93 = por %p91, %p92
      %p95 = scmp.ne.s32.totalorder %s80, %s94
      %p96 = scmp.eq.s32.totalorder %s28, 0
      %p97 = por %p95, %p96
      %s99 = sadd.s32 %s98, 1
      %p102 = scmp.eq.s32.totalorder %s22, 1
      %p103 = scmp.ne.s32.totalorder %s98, %s100
      %p104 = scmp.eq.s32.totalorder %s22, 0
      %p105 = por %p103, %p104
      %p106 = scmp.ne.s32.totalorder %s98, %s100
      %p107 = scmp.eq.s32.totalorder %s27, 1
      %p108 = por %p106, %p107
      %p109 = scmp.ne.s32.totalorder %s100, %s101
      %p110 = scmp.eq.s32.totalorder %s27, 0
      %p111 = por %p109, %p110
      %p112 = scmp.ne.s32.totalorder %s100, %s101
      %p113 = scmp.eq.s32.totalorder %s28, 1
      %p114 = por %p112, %p113
      %p116 = scmp.ne.s32.totalorder %s101, %s115
      %p117 = scmp.eq.s32.totalorder %s28, 0
      %p118 = por %p116, %p117
      %s120 = sadd.s32 %s119, 1
      %p123 = scmp.eq.s32.totalorder %s22, 1
      %p124 = scmp.ne.s32.totalorder %s119, %s121
      %p125 = scmp.eq.s32.totalorder %s22, 0
      %p126 = por %p124, %p125
      %p127 = scmp.ne.s32.totalorder %s119, %s121
      %p128 = scmp.eq.s32.totalorder %s27, 1
      %p129 = por %p127, %p128
      %p130 = scmp.ne.s32.totalorder %s121, %s122
      %p131 = scmp.eq.s32.totalorder %s27, 0
      %p132 = por %p130, %p131
      %p133 = scmp.ne.s32.totalorder %s121, %s122
      %p134 = scmp.eq.s32.totalorder %s28, 1
      %p135 = por %p133, %p134
      %p137 = scmp.ne.s32.totalorder %s122, %s136
      %p138 = scmp.eq.s32.totalorder %s28, 0
      %p139 = por %p137, %p138
      %s141 = sadd.s32 %s140, 1
      %p144 = scmp.eq.s32.totalorder %s22, 1
      %p145 = scmp.ne.s32.totalorder %s140, %s142
      %p146 = scmp.eq.s32.totalorder %s22, 0
      %p147 = por %p145, %p146
      %p148 = scmp.ne.s32.totalorder %s140, %s142
      %p149 = scmp.eq.s32.totalorder %s27, 1
      %p150 = por %p148, %p149
      %p151 = scmp.ne.s32.totalorder %s142, %s143
      %p152 = scmp.eq.s32.totalorder %s27, 0
      %p153 = por %p151, %p152
      %p154 = scmp.ne.s32.totalorder %s142, %s143
      %p155 = scmp.eq.s32.totalorder %s28, 1
      %p156 = por %p154, %p155
      %p158 = scmp.ne.s32.totalorder %s143, %s157
      %p159 = scmp.eq.s32.totalorder %s28, 0
      %p160 = por %p158, %p159
      %s162 = sadd.s32 %s161, 1
      %p165 = scmp.eq.s32.totalorder %s22, 1
      %p166 = scmp.ne.s32.totalorder %s161, %s163
      %p167 = scmp.eq.s32.totalorder %s22, 0
      %p168 = por %p166, %p167
      %p169 = scmp.ne.s32.totalorder %s161, %s163
      %p170 = scmp.eq.s32.totalorder %s27, 1
      %p171 = por %p169, %p170
      %p172 = scmp.ne.s32.totalorder %s163, %s164
      %p173 = scmp.eq.s32.totalorder %s27, 0
      %p174 = por %p172, %p173
      %p175 = scmp.ne.s32.totalorder %s163, %s164
      %p176 = scmp.eq.s32.totalorder %s28, 1
      %p177 = por %p175, %p176
      %p179 = scmp.ne.s32.totalorder %s164, %s178
      %p180 = scmp.eq.s32.totalorder %s28, 0
      %p181 = por %p179, %p180
      %s182 = ssub.s32 %s22, %s29
      %p183 = scmp.eq.s32.totalorder %s182, 0
      %s185 = sadd.s32 %s184, 1
      %s186 = scalar_select %p183, %s184, %s185
      %p189 = pneg %p183
      %p190 = scmp.eq.s32.totalorder %s22, 1
      %p191 = por %p189, %p190
      %p192 = scmp.ne.s32.totalorder %s184, %s187
      %p193 = scmp.eq.s32.totalorder %s22, 0
      %p194 = por %p192, %p193
      %p195 = scmp.ne.s32.totalorder %s184, %s187
      %p196 = scmp.eq.s32.totalorder %s27, 1
      %p197 = por %p195, %p196
      %p198 = scmp.ne.s32.totalorder %s187, %s188
      %p199 = scmp.eq.s32.totalorder %s27, 0
      %p200 = por %p198, %p199
      %p201 = scmp.ne.s32.totalorder %s187, %s188
      %p202 = scmp.eq.s32.totalorder %s28, 1
      %p203 = por %p201, %p202
      %p205 = scmp.ne.s32.totalorder %s188, %s204
      %p206 = scmp.eq.s32.totalorder %s28, 0
      %p207 = por %p205, %p206
      %p208 = scmp.le.s32.totalorder 1, %s22
      %p209 = scmp.lt.s32.totalorder %s22, 3
      %p210 = pnand %p208, %p209
      %p211 = pneg %p210
      // Predicated region
      $region9: #{tpu_custom_call.1} parent=5 // pred_check
        _
      $region10: #{tpu_custom_call.1} parent=5 // pred_check_branch
        %213 = sbr.rel (%p210) target = $region12
      $region11: #{tpu_custom_call.1} parent=5 // pred_region
        %s214 = ssub.s32 %s22, 1
        // Predicated region
        $region13: #{tpu_custom_call.1} parent=11 // pred_check
          %p215 = pneg %p69
        $region14: #{tpu_custom_call.1} parent=11 // pred_check_branch
          %217 = sbr.rel (%p215) target = $region16
        $region15: #{tpu_custom_call.1} parent=11 // pred_region
          %s219 = ssub.s32 256, 256
          %220 = vsyncadd [#allocation6], %s219
          %s221 = sshll.u32 [#allocation5], 4
          %s222 = int_to_ptr.vmem [resolvable:$true] %s221
          %227 = dma.hbm_to_vmem [thread:$0]  %s1, 256, %s222, [#allocation6], 64, 64, 4
        $region16: #{tpu_custom_call.1} parent=11 // pred_fallthru
          _
        // Predicated region
        $region17: #{tpu_custom_call.1} parent=11 // pred_check
          %p228 = pneg %p90
        $region18: #{tpu_custom_call.1} parent=11 // pred_check_branch
          %230 = sbr.rel (%p228) target = $region20
        $region19: #{tpu_custom_call.1} parent=11 // pred_region
          %s232 = ssub.s32 16, 16
          %233 = vsyncadd [#allocation6], %s232
          %s235 = sshll.u32 [#allocation7], 4
          %s236 = int_to_ptr.vmem [resolvable:$true] %s235
          %238 = dma.hbm_to_vmem [thread:$0]  %s2, 16, %s236, [#allocation6]
        $region20: #{tpu_custom_call.1} parent=11 // pred_fallthru
          _
        // Predicated region
        $region21: #{tpu_custom_call.1} parent=11 // pred_check
          %p239 = pneg %p111
        $region22: #{tpu_custom_call.1} parent=11 // pred_check_branch
          %241 = sbr.rel (%p239) target = $region24
        $region23: #{tpu_custom_call.1} parent=11 // pred_region
          %s243 = ssub.s32 256, 256
          %244 = vsyncadd [#allocation9], %s243
          %s245 = sshll.u32 [#allocation8], 4
          %s246 = int_to_ptr.vmem [resolvable:$true] %s245
          %251 = dma.hbm_to_vmem [thread:$0]  %s3, 256, %s246, [#allocation9], 64, 64, 4
        $region24: #{tpu_custom_call.1} parent=11 // pred_fallthru
          _
        // Predicated region
        $region25: #{tpu_custom_call.1} parent=11 // pred_check
          %p252 = pneg %p132
        $region26: #{tpu_custom_call.1} parent=11 // pred_check_branch
          %254 = sbr.rel (%p252) target = $region28
        $region27: #{tpu_custom_call.1} parent=11 // pred_region
          %s256 = ssub.s32 16, 16
          %257 = vsyncadd [#allocation9], %s256
          %s259 = sshll.u32 [#allocation10], 4
          %s260 = int_to_ptr.vmem [resolvable:$true] %s259
          %262 = dma.hbm_to_vmem [thread:$0]  %s4, 16, %s260, [#allocation9]
        $region28: #{tpu_custom_call.1} parent=11 // pred_fallthru
          _
        // Predicated region
        $region29: #{tpu_custom_call.1} parent=11 // pred_check
          %p263 = pneg %p153
        $region30: #{tpu_custom_call.1} parent=11 // pred_check_branch
          %265 = sbr.rel (%p263) target = $region32
        $region31: #{tpu_custom_call.1} parent=11 // pred_region
          %s267 = ssub.s32 16, 16
          %268 = vsyncadd [#allocation12], %s267
          %s270 = sshll.u32 [#allocation11], 4
          %s271 = int_to_ptr.vmem [resolvable:$true] %s270
          %273 = dma.hbm_to_vmem [thread:$0]  %s5, 16, %s271, [#allocation12]
        $region32: #{tpu_custom_call.1} parent=11 // pred_fallthru
          _
        // Predicated region
        $region33: #{tpu_custom_call.1} parent=11 // pred_check
          %p274 = pneg %p174
        $region34: #{tpu_custom_call.1} parent=11 // pred_check_branch
          %276 = sbr.rel (%p274) target = $region36
        $region35: #{tpu_custom_call.1} parent=11 // pred_region
          %s278 = ssub.s32 16, 16
          %279 = vsyncadd [#allocation12], %s278
          %s281 = sshll.u32 [#allocation13], 4
          %s282 = int_to_ptr.vmem [resolvable:$true] %s281
          %284 = dma.hbm_to_vmem [thread:$0]  %s6, 16, %s282, [#allocation12]
        $region36: #{tpu_custom_call.1} parent=11 // pred_fallthru
          _
      $region12: #{tpu_custom_call.1} parent=5 // pred_fallthru
        _
      %p285 = scmp.lt.s32.totalorder %s22, 2
      // Predicated region
      $region37: #{tpu_custom_call.1} parent=5 // pred_check
        %p286 = pneg %p285
      $region38: #{tpu_custom_call.1} parent=5 // pred_check_branch
        %288 = sbr.rel (%p286) target = $region40
      $region39: #{tpu_custom_call.1} parent=5 // pred_region
        // Predicated region
        $region41: #{tpu_custom_call.1} parent=39 // pred_check
          %p289 = pneg %p42
        $region42: #{tpu_custom_call.1} parent=39 // pred_check_branch
          %291 = sbr.rel (%p289) target = $region44
        $region43: #{tpu_custom_call.1} parent=39 // pred_region
          %s292 = sand.u32 %s32, 1
          %s293 = scalar_lea.sflag [#allocation3], %s292
          %s294 = sand.u32 %s32, 1
          %s295 = smul.addr %s294, 8
          %s296 = scalar_lea.vmem [#allocation2], %s295
          %s298 = ssub.s32 128, 128
          %299 = vsyncadd %s293, %s298
          %s300 = smul.addr %s22, 128
          %s301 = scalar_lea.hbm %s0, %s300
          %s303 = sshll.u32 %s296, 4
          %s304 = int_to_ptr.vmem [resolvable:$true] %s303
          %306 = dma.hbm_to_vmem [thread:$0]  %s301, 128, %s304, %s293
        $region44: #{tpu_custom_call.1} parent=39 // pred_fallthru
          _
      $region40: #{tpu_custom_call.1} parent=5 // pred_fallthru
        _
      %p307 = scmp.le.s32.totalorder 1, %s22
      %p308 = scmp.lt.s32.totalorder %s22, 3
      %p309 = pnand %p307, %p308
      %p310 = pneg %p309
      // Predicated region
      $region45: #{tpu_custom_call.1} parent=5 // pred_check
        _
      $region46: #{tpu_custom_call.1} parent=5 // pred_check_branch
        %312 = sbr.rel (%p309) target = $region48
      $region47: #{tpu_custom_call.1} parent=5 // pred_region
        %s313 = ssub.s32 %s22, 1
        %s314 = sand.u32 %s35, 1
        %s315 = scalar_lea.sflag [#allocation3], %s314
        %s316 = sand.u32 %s35, 1
        %s317 = smul.addr %s316, 8
        %s318 = scalar_lea.vmem [#allocation2], %s317
        // Predicated region
        $region49: #{tpu_custom_call.1} parent=47 // pred_check
          %p319 = pneg %p48
        $region50: #{tpu_custom_call.1} parent=47 // pred_check_branch
          %321 = sbr.rel (%p319) target = $region52
        $region51: #{tpu_custom_call.1} parent=47 // pred_region
          %322 = dma.done %s315, 128
        $region52: #{tpu_custom_call.1} parent=47 // pred_fallthru
          _
        // Predicated region
        $region53: #{tpu_custom_call.1} parent=47 // pred_check
          %p323 = pneg %p69
        $region54: #{tpu_custom_call.1} parent=47 // pred_check_branch
          %325 = sbr.rel (%p323) target = $region56
        $region55: #{tpu_custom_call.1} parent=47 // pred_region
          %326 = dma.done [#allocation6], 256
        $region56: #{tpu_custom_call.1} parent=47 // pred_fallthru
          _
        // Predicated region
        $region57: #{tpu_custom_call.1} parent=47 // pred_check
          %p327 = pneg %p90
        $region58: #{tpu_custom_call.1} parent=47 // pred_check_branch
          %329 = sbr.rel (%p327) target = $region60
        $region59: #{tpu_custom_call.1} parent=47 // pred_region
          %330 = dma.done [#allocation6], 16
        $region60: #{tpu_custom_call.1} parent=47 // pred_fallthru
          _
        // Predicated region
        $region61: #{tpu_custom_call.1} parent=47 // pred_check
          %p331 = pneg %p111
        $region62: #{tpu_custom_call.1} parent=47 // pred_check_branch
          %333 = sbr.rel (%p331) target = $region64
        $region63: #{tpu_custom_call.1} parent=47 // pred_region
          %334 = dma.done [#allocation9], 256
        $region64: #{tpu_custom_call.1} parent=47 // pred_fallthru
          _
        // Predicated region
        $region65: #{tpu_custom_call.1} parent=47 // pred_check
          %p335 = pneg %p132
        $region66: #{tpu_custom_call.1} parent=47 // pred_check_branch
          %337 = sbr.rel (%p335) target = $region68
        $region67: #{tpu_custom_call.1} parent=47 // pred_region
          %338 = dma.done [#allocation9], 16
        $region68: #{tpu_custom_call.1} parent=47 // pred_fallthru
          _
        // Predicated region
        $region69: #{tpu_custom_call.1} parent=47 // pred_check
          %p339 = pneg %p153
        $region70: #{tpu_custom_call.1} parent=47 // pred_check_branch
          %341 = sbr.rel (%p339) target = $region72
        $region71: #{tpu_custom_call.1} parent=47 // pred_region
          %342 = dma.done [#allocation12], 16
        $region72: #{tpu_custom_call.1} parent=47 // pred_fallthru
          _
        // Predicated region
        $region73: #{tpu_custom_call.1} parent=47 // pred_check
          %p343 = pneg %p174
        $region74: #{tpu_custom_call.1} parent=47 // pred_check_branch
          %345 = sbr.rel (%p343) target = $region76
        $region75: #{tpu_custom_call.1} parent=47 // pred_region
          %346 = dma.done [#allocation12], 16
        $region76: #{tpu_custom_call.1} parent=47 // pred_fallthru
          _
        %s347 = sand.u32 %s35, 1
        %s348 = scalar_lea.sflag [#allocation3], %s347
        %s349 = sand.u32 %s35, 1
        %s350 = smul.addr %s349, 8
        %s351 = scalar_lea.vmem [#allocation2], %s350
        %p352 = pneg %p48
        %p353 = pneg %p45
        %p354 = pneg %p69
        %p355 = pneg %p66
        %p356 = pneg %p90
        %p357 = pneg %p87
        %p358 = pneg %p111
        %p359 = pneg %p108
        %p360 = pneg %p132
        %p361 = pneg %p129
        %p362 = pneg %p153
        %p363 = pneg %p150
        %p364 = pneg %p174
        %p365 = pneg %p171
        %p366 = pneg %p200
        %p367 = pneg %p197
        %s368 = sand.u32 %s187, 1
        %s369 = scalar_lea.sflag [#allocation4], %s368
        %s370 = sand.u32 %s187, 1
        %s371 = smul.addr %s370, 8
        %s372 = scalar_lea.vmem [#allocation14], %s371
        %v374 = vld [vmem:[%s318] sm:$0xff]
        %v375 = vld [vmem:[#allocation5] sm:$0xf]
        %v376 = vld [vmem:[#allocation5 + $0x4] sm:$0xf]
        %v377 = vld [vmem:[#allocation5 + $0x8] sm:$0xf]
        %v378 = vld [vmem:[#allocation5 + $0xc] sm:$0xf]
        %v379 = vpack.c.bf16 %v374, %v374
        %v380 = vld [vmem:[#allocation7] sm:$0x1]
        %v382 = vlaneseq
        %v383 = vshrl.u32 %v382, 7
        %v384 = vsub.s32 0, %v383
        %v385 = vrot.slane %v380, %v384
        %v391 = vunpack.c.l.b16 %v375
        %v392 = vunpack.c.l.b16 %v376
        %v393 = vunpack.c.l.b16 %v377
        %v394 = vunpack.c.l.b16 %v378
        %v395 = vpack.c.b16 %v392, %v391
        %v396 = vpack.c.b16 %v394, %v393
        %vm399 = vcmask 261120
        %v401 = vsel %vm399, %v379, 0
        %403 = vmatprep.subr.bf16.mxu0 0
        %404 = vmatpush1.bf16.msra.mxu0 %v395
        %405 = vmatprep.subr.bf16.mxu0 0
        %406 = vmatpush1.bf16.msra.mxu0 %v396
        %407 = vmatprep.subr.bf16.mxu0 0
        %408 = vmatpush1.bf16.msra.mxu0 0
        %409 = vmatprep.subr.bf16.mxu0 0
        %410 = vmatpush1.bf16.msra.mxu0 0
        %411 = vmatprep.subr.bf16.mxu0 0
        %412 = vmatpush1.bf16.msra.mxu0 0
        %413 = vmatprep.subr.bf16.mxu0 0
        %414 = vmatpush1.bf16.msra.mxu0 0
        %415 = vmatprep.subr.bf16.mxu0 0
        %416 = vmatpush1.bf16.msra.mxu0 0
        %417 = vmatprep.subr.bf16.mxu0 0
        %418 = vmatpush1.bf16.msra.mxu0 0
        %419 = vmatprep.subr.bf16.mxu0 0
        %420 = vmatpush1.bf16.msra.mxu0 0
        %421 = vmatprep.subr.bf16.mxu0 0
        %422 = vmatpush1.bf16.msra.mxu0 0
        %423 = vmatprep.subr.bf16.mxu0 0
        %424 = vmatpush1.bf16.msra.mxu0 0
        %425 = vmatprep.subr.bf16.mxu0 0
        %426 = vmatpush1.bf16.msra.mxu0 0
        %427 = vmatprep.subr.bf16.mxu0 0
        %428 = vmatpush1.bf16.msra.mxu0 0
        %429 = vmatprep.subr.bf16.mxu0 0
        %430 = vmatpush1.bf16.msra.mxu0 0
        %431 = vmatprep.subr.bf16.mxu0 0
        %432 = vmatpush1.bf16.msra.mxu0 0
        %433 = vmatprep.subr.bf16.mxu0 0
        %434 = vmatpush1.bf16.msra.mxu0 0
        %435 = vmatprep.mubr.bf16.mxu0 0
        %436 = vmatmul.mubr.bf16.gmra.mrb[0].mxu0 %v401
        %v437 = vpop.f32.mrb[0].mxu0
        %v438 = vadd.f32 %v385, %v437
        %v439 = vpop.f32.mrb[0].mxu0
        %v440 = vpop.f32.mrb[0].mxu0
        %v441 = vpop.f32.mrb[0].mxu0
        %442 = vdwg.mxu0
        %v443 = vld [vmem:[#allocation8] sm:$0xf]
        %v444 = vld [vmem:[#allocation8 + $0x4] sm:$0xf]
        %v445 = vld [vmem:[#allocation8 + $0x8] sm:$0xf]
        %v446 = vld [vmem:[#allocation8 + $0xc] sm:$0xf]
        %v447 = vlaneseq
        %v448 = vshrl.u32 %v447, 7
        %v449 = vlaneseq
        %v450 = vand.u32 %v449, 127
        %vm451 = vcmp.le.s32.totalorder %v450, %v448
        %v452 = vsel %vm451, 0.0, -inf
        %v453 = vpack.c.bf16 %v438, %v438
        %455 = vrot.lane.b32.xlu0 %v453, 96
        %v456 = vpop.permute.xlu0 %455
        %vm457 = vcmask 64512
        %v459 = vsel %vm457, %v453, 0
        %v462 = vsel %vm457, %v456, 0
        %464 = vmatprep.subr.bf16.mxu0 0
        %465 = vmatpush1.bf16.xpose.msra.mxu0 %v462
        %466 = vmatprep.subr.bf16.mxu0 0
        %467 = vmatpush1.bf16.xpose.msra.mxu0 0
        %468 = vmatprep.subr.bf16.mxu0 0
        %469 = vmatpush1.bf16.xpose.msra.mxu0 0
        %470 = vmatprep.subr.bf16.mxu0 0
        %471 = vmatpush1.bf16.xpose.msra.mxu0 0
        %472 = vmatprep.subr.bf16.mxu0 0
        %473 = vmatpush1.bf16.xpose.msra.mxu0 0
        %474 = vmatprep.subr.bf16.mxu0 0
        %475 = vmatpush1.bf16.xpose.msra.mxu0 0
        %476 = vmatprep.subr.bf16.mxu0 0
        %477 = vmatpush1.bf16.xpose.msra.mxu0 0
        %478 = vmatprep.subr.bf16.mxu0 0
        %479 = vmatpush1.bf16.xpose.msra.mxu0 0
        %480 = vmatprep.subr.bf16.mxu0 0
        %481 = vmatpush1.bf16.xpose.msra.mxu0 0
        %482 = vmatprep.subr.bf16.mxu0 0
        %483 = vmatpush1.bf16.xpose.msra.mxu0 0
        %484 = vmatprep.subr.bf16.mxu0 0
        %485 = vmatpush1.bf16.xpose.msra.mxu0 0
        %486 = vmatprep.subr.bf16.mxu0 0
        %487 = vmatpush1.bf16.xpose.msra.mxu0 0
        %488 = vmatprep.subr.bf16.mxu0 0
        %489 = vmatpush1.bf16.xpose.msra.mxu0 0
        %490 = vmatprep.subr.bf16.mxu0 0
        %491 = vmatpush1.bf16.xpose.msra.mxu0 0
        %492 = vmatprep.subr.bf16.mxu0 0
        %493 = vmatpush1.bf16.xpose.msra.mxu0 0
        %494 = vmatprep.subr.bf16.mxu0 0
        %495 = vmatpush1.bf16.xpose.msra.mxu0 0
        %496 = vmatprep.mubr.bf16.mxu0 0
        %497 = vmatmul.mubr.bf16.gmra.mrb[0].mxu0 %v459
        %v498 = vpop.f32.mrb[0].mxu0
        %v499 = vadd.f32 %v452, %v498
        %v500 = vpop.f32.mrb[0].mxu0
        %v501 = vpop.f32.mrb[0].mxu0
        %v502 = vpop.f32.mrb[0].mxu0
        %503 = vdwg.mxu0
        %v504 = vsel %vm457, %v499, -inf
        %505 = vmax.xlane.f32.xlu0 %v504
        %v506 = vpop.xlane.xlu0 %505
        %v507 = vsub.f32 %v499, %v506
        %v508 = vmul.f32 %v507, 1.442695
        %v509 = vpow.pop %v508
        %v510 = vsel %vm457, %v509, 0.0
        %511 = vadd.xlane.f32.xlu0 %v510
        %v512 = vpop.xlane.xlu0 %511
        %v513 = vrcp.pop %v512
        %v514 = vmul.f32 %v509, %v513
        %v515 = vpack.c.bf16 %v514, %v514
        %516 = vrot.lane.b32.xlu0 %v453, 64
        %v517 = vpop.permute.xlu0 %516
        %v519 = vsel %vm457, %v515, 0
        %vm521 = vcmask 1043456
        %v523 = vsel %vm521, %v517, 0
        %525 = vmatprep.subr.bf16.mxu0 0
        %526 = vmatpush1.bf16.msra.mxu0 %v523
        %527 = vmatprep.subr.bf16.mxu0 0
        %528 = vmatpush1.bf16.msra.mxu0 0
        %529 = vmatprep.subr.bf16.mxu0 0
        %530 = vmatpush1.bf16.msra.mxu0 0
        %531 = vmatprep.subr.bf16.mxu0 0
        %532 = vmatpush1.bf16.msra.mxu0 0
        %533 = vmatprep.subr.bf16.mxu0 0
        %534 = vmatpush1.bf16.msra.mxu0 0
        %535 = vmatprep.subr.bf16.mxu0 0
        %536 = vmatpush1.bf16.msra.mxu0 0
        %537 = vmatprep.subr.bf16.mxu0 0
        %538 = vmatpush1.bf16.msra.mxu0 0
        %539 = vmatprep.subr.bf16.mxu0 0
        %540 = vmatpush1.bf16.msra.mxu0 0
        %541 = vmatprep.subr.bf16.mxu0 0
        %542 = vmatpush1.bf16.msra.mxu0 0
        %543 = vmatprep.subr.bf16.mxu0 0
        %544 = vmatpush1.bf16.msra.mxu0 0
        %545 = vmatprep.subr.bf16.mxu0 0
        %546 = vmatpush1.bf16.msra.mxu0 0
        %547 = vmatprep.subr.bf16.mxu0 0
        %548 = vmatpush1.bf16.msra.mxu0 0
        %549 = vmatprep.subr.bf16.mxu0 0
        %550 = vmatpush1.bf16.msra.mxu0 0
        %551 = vmatprep.subr.bf16.mxu0 0
        %552 = vmatpush1.bf16.msra.mxu0 0
        %553 = vmatprep.subr.bf16.mxu0 0
        %554 = vmatpush1.bf16.msra.mxu0 0
        %555 = vmatprep.subr.bf16.mxu0 0
        %556 = vmatpush1.bf16.msra.mxu0 0
        %557 = vmatprep.mubr.bf16.mxu0 0
        %558 = vmatmul.mubr.bf16.gmra.mrb[0].mxu0 %v519
        %v559 = vpop.f32.mrb[0].mxu0
        %v560 = vadd.f32 0.0, %v559
        %v561 = vpop.f32.mrb[0].mxu0
        %v562 = vpop.f32.mrb[0].mxu0
        %v563 = vpop.f32.mrb[0].mxu0
        %564 = vdwg.mxu0
        %v565 = vpack.c.bf16 %v560, %v560
        %566 = vrot.lane.b32.xlu0 %v453, 120
        %v567 = vpop.permute.xlu0 %566
        %568 = vrot.lane.b32.xlu0 %v453, 88
        %v569 = vpop.permute.xlu0 %568
        %v571 = vsel %vm457, %v567, 0
        %v574 = vsel %vm457, %v569, 0
        %576 = vmatprep.subr.bf16.mxu0 0
        %577 = vmatpush1.bf16.xpose.msra.mxu0 %v574
        %578 = vmatprep.subr.bf16.mxu0 0
        %579 = vmatpush1.bf16.xpose.msra.mxu0 0
        %580 = vmatprep.subr.bf16.mxu0 0
        %581 = vmatpush1.bf16.xpose.msra.mxu0 0
        %582 = vmatprep.subr.bf16.mxu0 0
        %583 = vmatpush1.bf16.xpose.msra.mxu0 0
        %584 = vmatprep.subr.bf16.mxu0 0
        %585 = vmatpush1.bf16.xpose.msra.mxu0 0
        %586 = vmatprep.subr.bf16.mxu0 0
        %587 = vmatpush1.bf16.xpose.msra.mxu0 0
        %588 = vmatprep.subr.bf16.mxu0 0
        %589 = vmatpush1.bf16.xpose.msra.mxu0 0
        %590 = vmatprep.subr.bf16.mxu0 0
        %591 = vmatpush1.bf16.xpose.msra.mxu0 0
        %592 = vmatprep.subr.bf16.mxu0 0
        %593 = vmatpush1.bf16.xpose.msra.mxu0 0
        %594 = vmatprep.subr.bf16.mxu0 0
        %595 = vmatpush1.bf16.xpose.msra.mxu0 0
        %596 = vmatprep.subr.bf16.mxu0 0
        %597 = vmatpush1.bf16.xpose.msra.mxu0 0
        %598 = vmatprep.subr.bf16.mxu0 0
        %599 = vmatpush1.bf16.xpose.msra.mxu0 0
        %600 = vmatprep.subr.bf16.mxu0 0
        %601 = vmatpush1.bf16.xpose.msra.mxu0 0
        %602 = vmatprep.subr.bf16.mxu0 0
        %603 = vmatpush1.bf16.xpose.msra.mxu0 0
        %604 = vmatprep.subr.bf16.mxu0 0
        %605 = vmatpush1.bf16.xpose.msra.mxu0 0
        %606 = vmatprep.subr.bf16.mxu0 0
        %607 = vmatpush1.bf16.xpose.msra.mxu0 0
        %608 = vmatprep.mubr.bf16.mxu0 0
        %609 = vmatmul.mubr.bf16.gmra.mrb[0].mxu0 %v571
        %v610 = vpop.f32.mrb[0].mxu0
        %v611 = vadd.f32 %v452, %v610
        %v612 = vpop.f32.mrb[0].mxu0
        %v613 = vpop.f32.mrb[0].mxu0
        %v614 = vpop.f32.mrb[0].mxu0
        %615 = vdwg.mxu0
        %v616 = vsel %vm457, %v611, -inf
        %617 = vmax.xlane.f32.xlu0 %v616
        %v618 = vpop.xlane.xlu0 %617
        %v619 = vsub.f32 %v611, %v618
        %v620 = vmul.f32 %v619, 1.442695
        %v621 = vpow.pop %v620
        %v622 = vsel %vm457, %v621, 0.0
        %623 = vadd.xlane.f32.xlu0 %v622
        %v624 = vpop.xlane.xlu0 %623
        %v625 = vrcp.pop %v624
        %v626 = vmul.f32 %v621, %v625
        %v627 = vpack.c.bf16 %v626, %v626
        %628 = vrot.lane.b32.xlu0 %v453, 56
        %v629 = vpop.permute.xlu0 %628
        %v631 = vsel %vm457, %v627, 0
        %v634 = vsel %vm521, %v629, 0
        %636 = vmatprep.subr.bf16.mxu0 0
        %637 = vmatpush1.bf16.msra.mxu0 %v634
        %638 = vmatprep.subr.bf16.mxu0 0
        %639 = vmatpush1.bf16.msra.mxu0 0
        %640 = vmatprep.subr.bf16.mxu0 0
        %641 = vmatpush1.bf16.msra.mxu0 0
        %642 = vmatprep.subr.bf16.mxu0 0
        %643 = vmatpush1.bf16.msra.mxu0 0
        %644 = vmatprep.subr.bf16.mxu0 0
        %645 = vmatpush1.bf16.msra.mxu0 0
        %646 = vmatprep.subr.bf16.mxu0 0
        %647 = vmatpush1.bf16.msra.mxu0 0
        %648 = vmatprep.subr.bf16.mxu0 0
        %649 = vmatpush1.bf16.msra.mxu0 0
        %650 = vmatprep.subr.bf16.mxu0 0
        %651 = vmatpush1.bf16.msra.mxu0 0
        %652 = vmatprep.subr.bf16.mxu0 0
        %653 = vmatpush1.bf16.msra.mxu0 0
        %654 = vmatprep.subr.bf16.mxu0 0
        %655 = vmatpush1.bf16.msra.mxu0 0
        %656 = vmatprep.subr.bf16.mxu0 0
        %657 = vmatpush1.bf16.msra.mxu0 0
        %658 = vmatprep.subr.bf16.mxu0 0
        %659 = vmatpush1.bf16.msra.mxu0 0
        %660 = vmatprep.subr.bf16.mxu0 0
        %661 = vmatpush1.bf16.msra.mxu0 0
        %662 = vmatprep.subr.bf16.mxu0 0
        %663 = vmatpush1.bf16.msra.mxu0 0
        %664 = vmatprep.subr.bf16.mxu0 0
        %665 = vmatpush1.bf16.msra.mxu0 0
        %666 = vmatprep.subr.bf16.mxu0 0
        %667 = vmatpush1.bf16.msra.mxu0 0
        %668 = vmatprep.mubr.bf16.mxu0 0
        %669 = vmatmul.mubr.bf16.gmra.mrb[0].mxu0 %v631
        %v670 = vpop.f32.mrb[0].mxu0
        %v671 = vadd.f32 0.0, %v670
        %v672 = vpop.f32.mrb[0].mxu0
        %v673 = vpop.f32.mrb[0].mxu0
        %v674 = vpop.f32.mrb[0].mxu0
        %675 = vdwg.mxu0
        %v676 = vpack.c.bf16 %v671, %v671
        %v678 = vsel %vm457, %v676, 0
        %v681 = vsel %vm521, %v444, 0
        %683 = vmatprep.subr.bf16.mxu0 0
        %684 = vmatpush1.bf16.msra.mxu0 %v681
        %685 = vmatprep.subr.bf16.mxu0 0
        %686 = vmatpush1.bf16.msra.mxu0 0
        %687 = vmatprep.subr.bf16.mxu0 0
        %688 = vmatpush1.bf16.msra.mxu0 0
        %689 = vmatprep.subr.bf16.mxu0 0
        %690 = vmatpush1.bf16.msra.mxu0 0
        %691 = vmatprep.subr.bf16.mxu0 0
        %692 = vmatpush1.bf16.msra.mxu0 0
        %693 = vmatprep.subr.bf16.mxu0 0
        %694 = vmatpush1.bf16.msra.mxu0 0
        %695 = vmatprep.subr.bf16.mxu0 0
        %696 = vmatpush1.bf16.msra.mxu0 0
        %697 = vmatprep.subr.bf16.mxu0 0
        %698 = vmatpush1.bf16.msra.mxu0 0
        %699 = vmatprep.subr.bf16.mxu0 0
        %700 = vmatpush1.bf16.msra.mxu0 0
        %701 = vmatprep.subr.bf16.mxu0 0
        %702 = vmatpush1.bf16.msra.mxu0 0
        %703 = vmatprep.subr.bf16.mxu0 0
        %704 = vmatpush1.bf16.msra.mxu0 0
        %705 = vmatprep.subr.bf16.mxu0 0
        %706 = vmatpush1.bf16.msra.mxu0 0
        %707 = vmatprep.subr.bf16.mxu0 0
        %708 = vmatpush1.bf16.msra.mxu0 0
        %709 = vmatprep.subr.bf16.mxu0 0
        %710 = vmatpush1.bf16.msra.mxu0 0
        %711 = vmatprep.subr.bf16.mxu0 0
        %712 = vmatpush1.bf16.msra.mxu0 0
        %713 = vmatprep.subr.bf16.mxu0 0
        %714 = vmatpush1.bf16.msra.mxu0 0
        %715 = vmatprep.mubr.bf16.mxu0 0
        %716 = vmatmul.mubr.bf16.gmra.mrb[0].mxu0 %v678
        %v717 = vpop.f32.mrb[0].mxu0
        %v718 = vadd.f32 0.0, %v717
        %v719 = vpop.f32.mrb[0].mxu0
        %v720 = vpop.f32.mrb[0].mxu0
        %v721 = vpop.f32.mrb[0].mxu0
        %722 = vdwg.mxu0
        %v724 = vsel %vm457, %v565, 0
        %v727 = vsel %vm521, %v443, 0
        %729 = vmatprep.subr.bf16.mxu0 0
        %730 = vmatpush1.bf16.msra.mxu0 %v727
        %731 = vmatprep.subr.bf16.mxu0 0
        %732 = vmatpush1.bf16.msra.mxu0 0
        %733 = vmatprep.subr.bf16.mxu0 0
        %734 = vmatpush1.bf16.msra.mxu0 0
        %735 = vmatprep.subr.bf16.mxu0 0
        %736 = vmatpush1.bf16.msra.mxu0 0
        %737 = vmatprep.subr.bf16.mxu0 0
        %738 = vmatpush1.bf16.msra.mxu0 0
        %739 = vmatprep.subr.bf16.mxu0 0
        %740 = vmatpush1.bf16.msra.mxu0 0
        %741 = vmatprep.subr.bf16.mxu0 0
        %742 = vmatpush1.bf16.msra.mxu0 0
        %743 = vmatprep.subr.bf16.mxu0 0
        %744 = vmatpush1.bf16.msra.mxu0 0
        %745 = vmatprep.subr.bf16.mxu0 0
        %746 = vmatpush1.bf16.msra.mxu0 0
        %747 = vmatprep.subr.bf16.mxu0 0
        %748 = vmatpush1.bf16.msra.mxu0 0
        %749 = vmatprep.subr.bf16.mxu0 0
        %750 = vmatpush1.bf16.msra.mxu0 0
        %751 = vmatprep.subr.bf16.mxu0 0
        %752 = vmatpush1.bf16.msra.mxu0 0
        %753 = vmatprep.subr.bf16.mxu0 0
        %754 = vmatpush1.bf16.msra.mxu0 0
        %755 = vmatprep.subr.bf16.mxu0 0
        %756 = vmatpush1.bf16.msra.mxu0 0
        %757 = vmatprep.subr.bf16.mxu0 0
        %758 = vmatpush1.bf16.msra.mxu0 0
        %759 = vmatprep.subr.bf16.mxu0 0
        %760 = vmatpush1.bf16.msra.mxu0 0
        %761 = vmatprep.mubr.bf16.mxu0 0
        %762 = vmatmul.mubr.bf16.gmra.mrb[0].mxu0 %v724
        %v763 = vpop.f32.mrb[0].mxu0
        %v764 = vadd.f32 %v718, %v763
        %v765 = vpop.f32.mrb[0].mxu0
        %v766 = vpop.f32.mrb[0].mxu0
        %v767 = vpop.f32.mrb[0].mxu0
        %768 = vdwg.mxu0
        %769 = vrot.lane.b32.xlu0 %v453, 112
        %v770 = vpop.permute.xlu0 %769
        %771 = vrot.lane.b32.xlu0 %v453, 80
        %v772 = vpop.permute.xlu0 %771
        %v774 = vsel %vm457, %v770, 0
        %v777 = vsel %vm457, %v772, 0
        %779 = vmatprep.subr.bf16.mxu0 0
        %780 = vmatpush1.bf16.xpose.msra.mxu0 %v777
        %781 = vmatprep.subr.bf16.mxu0 0
        %782 = vmatpush1.bf16.xpose.msra.mxu0 0
        %783 = vmatprep.subr.bf16.mxu0 0
        %784 = vmatpush1.bf16.xpose.msra.mxu0 0
        %785 = vmatprep.subr.bf16.mxu0 0
        %786 = vmatpush1.bf16.xpose.msra.mxu0 0
        %787 = vmatprep.subr.bf16.mxu0 0
        %788 = vmatpush1.bf16.xpose.msra.mxu0 0
        %789 = vmatprep.subr.bf16.mxu0 0
        %790 = vmatpush1.bf16.xpose.msra.mxu0 0
        %791 = vmatprep.subr.bf16.mxu0 0
        %792 = vmatpush1.bf16.xpose.msra.mxu0 0
        %793 = vmatprep.subr.bf16.mxu0 0
        %794 = vmatpush1.bf16.xpose.msra.mxu0 0
        %795 = vmatprep.subr.bf16.mxu0 0
        %796 = vmatpush1.bf16.xpose.msra.mxu0 0
        %797 = vmatprep.subr.bf16.mxu0 0
        %798 = vmatpush1.bf16.xpose.msra.mxu0 0
        %799 = vmatprep.subr.bf16.mxu0 0
        %800 = vmatpush1.bf16.xpose.msra.mxu0 0
        %801 = vmatprep.subr.bf16.mxu0 0
        %802 = vmatpush1.bf16.xpose.msra.mxu0 0
        %803 = vmatprep.subr.bf16.mxu0 0
        %804 = vmatpush1.bf16.xpose.msra.mxu0 0
        %805 = vmatprep.subr.bf16.mxu0 0
        %806 = vmatpush1.bf16.xpose.msra.mxu0 0
        %807 = vmatprep.subr.bf16.mxu0 0
        %808 = vmatpush1.bf16.xpose.msra.mxu0 0
        %809 = vmatprep.subr.bf16.mxu0 0
        %810 = vmatpush1.bf16.xpose.msra.mxu0 0
        %811 = vmatprep.mubr.bf16.mxu0 0
        %812 = vmatmul.mubr.bf16.gmra.mrb[0].mxu0 %v774
        %v813 = vpop.f32.mrb[0].mxu0
        %v814 = vadd.f32 %v452, %v813
        %v815 = vpop.f32.mrb[0].mxu0
        %v816 = vpop.f32.mrb[0].mxu0
        %v817 = vpop.f32.mrb[0].mxu0
        %818 = vdwg.mxu0
        %v819 = vsel %vm457, %v814, -inf
        %820 = vmax.xlane.f32.xlu0 %v819
        %v821 = vpop.xlane.xlu0 %820
        %v822 = vsub.f32 %v814, %v821
        %v823 = vmul.f32 %v822, 1.442695
        %v824 = vpow.pop %v823
        %v825 = vsel %vm457, %v824, 0.0
        %826 = vadd.xlane.f32.xlu0 %v825
        %v827 = vpop.xlane.xlu0 %826
        %v828 = vrcp.pop %v827
        %v829 = vmul.f32 %v824, %v828
        %v830 = vpack.c.bf16 %v829, %v829
        %831 = vrot.lane.b32.xlu0 %v453, 48
        %v832 = vpop.permute.xlu0 %831
        %v834 = vsel %vm457, %v830, 0
        %v837 = vsel %vm521, %v832, 0
        %839 = vmatprep.subr.bf16.mxu0 0
        %840 = vmatpush1.bf16.msra.mxu0 %v837
        %841 = vmatprep.subr.bf16.mxu0 0
        %842 = vmatpush1.bf16.msra.mxu0 0
        %843 = vmatprep.subr.bf16.mxu0 0
        %844 = vmatpush1.bf16.msra.mxu0 0
        %845 = vmatprep.subr.bf16.mxu0 0
        %846 = vmatpush1.bf16.msra.mxu0 0
        %847 = vmatprep.subr.bf16.mxu0 0
        %848 = vmatpush1.bf16.msra.mxu0 0
        %849 = vmatprep.subr.bf16.mxu0 0
        %850 = vmatpush1.bf16.msra.mxu0 0
        %851 = vmatprep.subr.bf16.mxu0 0
        %852 = vmatpush1.bf16.msra.mxu0 0
        %853 = vmatprep.subr.bf16.mxu0 0
        %854 = vmatpush1.bf16.msra.mxu0 0
        %855 = vmatprep.subr.bf16.mxu0 0
        %856 = vmatpush1.bf16.msra.mxu0 0
        %857 = vmatprep.subr.bf16.mxu0 0
        %858 = vmatpush1.bf16.msra.mxu0 0
        %859 = vmatprep.subr.bf16.mxu0 0
        %860 = vmatpush1.bf16.msra.mxu0 0
        %861 = vmatprep.subr.bf16.mxu0 0
        %862 = vmatpush1.bf16.msra.mxu0 0
        %863 = vmatprep.subr.bf16.mxu0 0
        %864 = vmatpush1.bf16.msra.mxu0 0
        %865 = vmatprep.subr.bf16.mxu0 0
        %866 = vmatpush1.bf16.msra.mxu0 0
        %867 = vmatprep.subr.bf16.mxu0 0
        %868 = vmatpush1.bf16.msra.mxu0 0
        %869 = vmatprep.subr.bf16.mxu0 0
        %870 = vmatpush1.bf16.msra.mxu0 0
        %871 = vmatprep.mubr.bf16.mxu0 0
        %872 = vmatmul.mubr.bf16.gmra.mrb[0].mxu0 %v834
        %v873 = vpop.f32.mrb[0].mxu0
        %v874 = vadd.f32 0.0, %v873
        %v875 = vpop.f32.mrb[0].mxu0
        %v876 = vpop.f32.mrb[0].mxu0
        %v877 = vpop.f32.mrb[0].mxu0
        %878 = vdwg.mxu0
        %v879 = vpack.c.bf16 %v874, %v874
        %v881 = vsel %vm457, %v879, 0
        %v884 = vsel %vm521, %v445, 0
        %886 = vmatprep.subr.bf16.mxu0 0
        %887 = vmatpush1.bf16.msra.mxu0 %v884
        %888 = vmatprep.subr.bf16.mxu0 0
        %889 = vmatpush1.bf16.msra.mxu0 0
        %890 = vmatprep.subr.bf16.mxu0 0
        %891 = vmatpush1.bf16.msra.mxu0 0
        %892 = vmatprep.subr.bf16.mxu0 0
        %893 = vmatpush1.bf16.msra.mxu0 0
        %894 = vmatprep.subr.bf16.mxu0 0
        %895 = vmatpush1.bf16.msra.mxu0 0
        %896 = vmatprep.subr.bf16.mxu0 0
        %897 = vmatpush1.bf16.msra.mxu0 0
        %898 = vmatprep.subr.bf16.mxu0 0
        %899 = vmatpush1.bf16.msra.mxu0 0
        %900 = vmatprep.subr.bf16.mxu0 0
        %901 = vmatpush1.bf16.msra.mxu0 0
        %902 = vmatprep.subr.bf16.mxu0 0
        %903 = vmatpush1.bf16.msra.mxu0 0
        %904 = vmatprep.subr.bf16.mxu0 0
        %905 = vmatpush1.bf16.msra.mxu0 0
        %906 = vmatprep.subr.bf16.mxu0 0
        %907 = vmatpush1.bf16.msra.mxu0 0
        %908 = vmatprep.subr.bf16.mxu0 0
        %909 = vmatpush1.bf16.msra.mxu0 0
        %910 = vmatprep.subr.bf16.mxu0 0
        %911 = vmatpush1.bf16.msra.mxu0 0
        %912 = vmatprep.subr.bf16.mxu0 0
        %913 = vmatpush1.bf16.msra.mxu0 0
        %914 = vmatprep.subr.bf16.mxu0 0
        %915 = vmatpush1.bf16.msra.mxu0 0
        %916 = vmatprep.subr.bf16.mxu0 0
        %917 = vmatpush1.bf16.msra.mxu0 0
        %918 = vmatprep.mubr.bf16.mxu0 0
        %919 = vmatmul.mubr.bf16.gmra.mrb[0].mxu0 %v881
        %v920 = vpop.f32.mrb[0].mxu0
        %v921 = vadd.f32 0.0, %v920
        %v922 = vpop.f32.mrb[0].mxu0
        %v923 = vpop.f32.mrb[0].mxu0
        %v924 = vpop.f32.mrb[0].mxu0
        %925 = vdwg.mxu0
        %v926 = vadd.f32 %v764, %v921
        %927 = vrot.lane.b32.xlu0 %v453, 104
        %v928 = vpop.permute.xlu0 %927
        %929 = vrot.lane.b32.xlu0 %v453, 72
        %v930 = vpop.permute.xlu0 %929
        %v932 = vsel %vm457, %v928, 0
        %v935 = vsel %vm457, %v930, 0
        %937 = vmatprep.subr.bf16.mxu0 0
        %938 = vmatpush1.bf16.xpose.msra.mxu0 %v935
        %939 = vmatprep.subr.bf16.mxu0 0
        %940 = vmatpush1.bf16.xpose.msra.mxu0 0
        %941 = vmatprep.subr.bf16.mxu0 0
        %942 = vmatpush1.bf16.xpose.msra.mxu0 0
        %943 = vmatprep.subr.bf16.mxu0 0
        %944 = vmatpush1.bf16.xpose.msra.mxu0 0
        %945 = vmatprep.subr.bf16.mxu0 0
        %946 = vmatpush1.bf16.xpose.msra.mxu0 0
        %947 = vmatprep.subr.bf16.mxu0 0
        %948 = vmatpush1.bf16.xpose.msra.mxu0 0
        %949 = vmatprep.subr.bf16.mxu0 0
        %950 = vmatpush1.bf16.xpose.msra.mxu0 0
        %951 = vmatprep.subr.bf16.mxu0 0
        %952 = vmatpush1.bf16.xpose.msra.mxu0 0
        %953 = vmatprep.subr.bf16.mxu0 0
        %954 = vmatpush1.bf16.xpose.msra.mxu0 0
        %955 = vmatprep.subr.bf16.mxu0 0
        %956 = vmatpush1.bf16.xpose.msra.mxu0 0
        %957 = vmatprep.subr.bf16.mxu0 0
        %958 = vmatpush1.bf16.xpose.msra.mxu0 0
        %959 = vmatprep.subr.bf16.mxu0 0
        %960 = vmatpush1.bf16.xpose.msra.mxu0 0
        %961 = vmatprep.subr.bf16.mxu0 0
        %962 = vmatpush1.bf16.xpose.msra.mxu0 0
        %963 = vmatprep.subr.bf16.mxu0 0
        %964 = vmatpush1.bf16.xpose.msra.mxu0 0
        %965 = vmatprep.subr.bf16.mxu0 0
        %966 = vmatpush1.bf16.xpose.msra.mxu0 0
        %967 = vmatprep.subr.bf16.mxu0 0
        %968 = vmatpush1.bf16.xpose.msra.mxu0 0
        %969 = vmatprep.mubr.bf16.mxu0 0
        %970 = vmatmul.mubr.bf16.gmra.mrb[0].mxu0 %v932
        %v971 = vpop.f32.mrb[0].mxu0
        %v972 = vadd.f32 %v452, %v971
        %v973 = vpop.f32.mrb[0].mxu0
        %v974 = vpop.f32.mrb[0].mxu0
        %v975 = vpop.f32.mrb[0].mxu0
        %976 = vdwg.mxu0
        %v977 = vsel %vm457, %v972, -inf
        %978 = vmax.xlane.f32.xlu0 %v977
        %v979 = vpop.xlane.xlu0 %978
        %v980 = vsub.f32 %v972, %v979
        %v981 = vmul.f32 %v980, 1.442695
        %v982 = vpow.pop %v981
        %v983 = vsel %vm457, %v982, 0.0
        %984 = vadd.xlane.f32.xlu0 %v983
        %v985 = vpop.xlane.xlu0 %984
        %v986 = vrcp.pop %v985
        %v987 = vmul.f32 %v982, %v986
        %v988 = vpack.c.bf16 %v987, %v987
        %989 = vrot.lane.b32.xlu0 %v453, 40
        %v990 = vpop.permute.xlu0 %989
        %v992 = vsel %vm457, %v988, 0
        %v995 = vsel %vm521, %v990, 0
        %997 = vmatprep.subr.bf16.mxu0 0
        %998 = vmatpush1.bf16.msra.mxu0 %v995
        %999 = vmatprep.subr.bf16.mxu0 0
        %1000 = vmatpush1.bf16.msra.mxu0 0
        %1001 = vmatprep.subr.bf16.mxu0 0
        %1002 = vmatpush1.bf16.msra.mxu0 0
        %1003 = vmatprep.subr.bf16.mxu0 0
        %1004 = vmatpush1.bf16.msra.mxu0 0
        %1005 = vmatprep.subr.bf16.mxu0 0
        %1006 = vmatpush1.bf16.msra.mxu0 0
        %1007 = vmatprep.subr.bf16.mxu0 0
        %1008 = vmatpush1.bf16.msra.mxu0 0
        %1009 = vmatprep.subr.bf16.mxu0 0
        %1010 = vmatpush1.bf16.msra.mxu0 0
        %1011 = vmatprep.subr.bf16.mxu0 0
        %1012 = vmatpush1.bf16.msra.mxu0 0
        %1013 = vmatprep.subr.bf16.mxu0 0
        %1014 = vmatpush1.bf16.msra.mxu0 0
        %1015 = vmatprep.subr.bf16.mxu0 0
        %1016 = vmatpush1.bf16.msra.mxu0 0
        %1017 = vmatprep.subr.bf16.mxu0 0
        %1018 = vmatpush1.bf16.msra.mxu0 0
        %1019 = vmatprep.subr.bf16.mxu0 0
        %1020 = vmatpush1.bf16.msra.mxu0 0
        %1021 = vmatprep.subr.bf16.mxu0 0
        %1022 = vmatpush1.bf16.msra.mxu0 0
        %1023 = vmatprep.subr.bf16.mxu0 0
        %1024 = vmatpush1.bf16.msra.mxu0 0
        %1025 = vmatprep.subr.bf16.mxu0 0
        %1026 = vmatpush1.bf16.msra.mxu0 0
        %1027 = vmatprep.subr.bf16.mxu0 0
        %1028 = vmatpush1.bf16.msra.mxu0 0
        %1029 = vmatprep.mubr.bf16.mxu0 0
        %1030 = vmatmul.mubr.bf16.gmra.mrb[0].mxu0 %v992
        %v1031 = vpop.f32.mrb[0].mxu0
        %v1032 = vadd.f32 0.0, %v1031
        %v1033 = vpop.f32.mrb[0].mxu0
        %v1034 = vpop.f32.mrb[0].mxu0
        %v1035 = vpop.f32.mrb[0].mxu0
        %1036 = vdwg.mxu0
        %v1037 = vpack.c.bf16 %v1032, %v1032
        %v1039 = vsel %vm457, %v1037, 0
        %v1042 = vsel %vm521, %v446, 0
        %1044 = vmatprep.subr.bf16.mxu0 0
        %1045 = vmatpush1.bf16.msra.mxu0 %v1042
        %1046 = vmatprep.subr.bf16.mxu0 0
        %1047 = vmatpush1.bf16.msra.mxu0 0
        %1048 = vmatprep.subr.bf16.mxu0 0
        %1049 = vmatpush1.bf16.msra.mxu0 0
        %1050 = vmatprep.subr.bf16.mxu0 0
        %1051 = vmatpush1.bf16.msra.mxu0 0
        %1052 = vmatprep.subr.bf16.mxu0 0
        %1053 = vmatpush1.bf16.msra.mxu0 0
        %1054 = vmatprep.subr.bf16.mxu0 0
        %1055 = vmatpush1.bf16.msra.mxu0 0
        %1056 = vmatprep.subr.bf16.mxu0 0
        %1057 = vmatpush1.bf16.msra.mxu0 0
        %1058 = vmatprep.subr.bf16.mxu0 0
        %1059 = vmatpush1.bf16.msra.mxu0 0
        %1060 = vmatprep.subr.bf16.mxu0 0
        %1061 = vmatpush1.bf16.msra.mxu0 0
        %1062 = vmatprep.subr.bf16.mxu0 0
        %1063 = vmatpush1.bf16.msra.mxu0 0
        %1064 = vmatprep.subr.bf16.mxu0 0
        %1065 = vmatpush1.bf16.msra.mxu0 0
        %1066 = vmatprep.subr.bf16.mxu0 0
        %1067 = vmatpush1.bf16.msra.mxu0 0
        %1068 = vmatprep.subr.bf16.mxu0 0
        %1069 = vmatpush1.bf16.msra.mxu0 0
        %1070 = vmatprep.subr.bf16.mxu0 0
        %1071 = vmatpush1.bf16.msra.mxu0 0
        %1072 = vmatprep.subr.bf16.mxu0 0
        %1073 = vmatpush1.bf16.msra.mxu0 0
        %1074 = vmatprep.subr.bf16.mxu0 0
        %1075 = vmatpush1.bf16.msra.mxu0 0
        %1076 = vmatprep.mubr.bf16.mxu0 0
        %1077 = vmatmul.mubr.bf16.gmra.mrb[0].mxu0 %v1039
        %v1078 = vpop.f32.mrb[0].mxu0
        %v1079 = vadd.f32 0.0, %v1078
        %v1080 = vpop.f32.mrb[0].mxu0
        %v1081 = vpop.f32.mrb[0].mxu0
        %v1082 = vpop.f32.mrb[0].mxu0
        %1083 = vdwg.mxu0
        %v1084 = vadd.f32 %v926, %v1079
        %v1085 = vld [vmem:[#allocation10] sm:$0x1]
        %v1087 = vlaneseq
        %v1088 = vshrl.u32 %v1087, 7
        %v1089 = vsub.s32 0, %v1088
        %v1090 = vrot.slane %v1085, %v1089
        %v1092 = vadd.f32 %v1084, %v1090
        %v1093 = vadd.f32 %v374, %v1092
        %v1094 = vld [vmem:[#allocation11] sm:$0x1]
        %v1095 = vld [vmem:[#allocation13] sm:$0x1]
        %v1096 = vsel %vm399, %v1093, 0.0
        %1097 = vadd.xlane.f32.xlu0 %v1096
        %v1098 = vpop.xlane.xlu0 %1097
        %v1099 = vrcp.pop 32.0
        %v1100 = vmul.f32 %v1098, %v1099
        %v1101 = vsub.f32 %v1093, %v1100
        %v1102 = vmul.f32 %v1101, %v1101
        %v1103 = vsel %vm399, %v1102, 0.0
        %1104 = vadd.xlane.f32.xlu0 %v1103
        %v1105 = vpop.xlane.xlu0 %1104
        %v1106 = vmul.f32 %v1105, %v1099
        %v1107 = vadd.f32 %v1106, 1e-05
        %v1108 = vrsqrt.pop %v1107
        %v1109 = vmul.f32 %v1101, %v1108
        %v1111 = vlaneseq
        %v1112 = vshrl.u32 %v1111, 7
        %v1113 = vsub.s32 0, %v1112
        %v1114 = vrot.slane %v1094, %v1113
        %v1116 = vmul.f32 %v1109, %v1114
        %v1118 = vlaneseq
        %v1119 = vshrl.u32 %v1118, 7
        %v1120 = vsub.s32 0, %v1119
        %v1121 = vrot.slane %v1095, %v1120
        %v1123 = vadd.f32 %v1116, %v1121
        %1124 = vst.msk [vmem:[%s372] sm:$0xff] %vm399, %v1123
        %s1125 = sand.u32 %s187, 1
        %s1126 = scalar_lea.sflag [#allocation4], %s1125
        %s1127 = sand.u32 %s187, 1
        %s1128 = smul.addr %s1127, 8
        %s1129 = scalar_lea.vmem [#allocation14], %s1128
        // Predicated region
        $region77: #{tpu_custom_call.1} parent=47 // pred_check
          %p1130 = pneg %p197
        $region78: #{tpu_custom_call.1} parent=47 // pred_check_branch
          %1132 = sbr.rel (%p1130) target = $region80
        $region79: #{tpu_custom_call.1} parent=47 // pred_region
          %s1134 = ssub.s32 128, 128
          %1135 = vsyncadd %s1126, %s1134
          %s1136 = smul.addr %s27, 128
          %s1137 = scalar_lea.hbm %s7, %s1136
          %s1139 = sshll.u32 %s1129, 4
          %s1140 = int_to_ptr.vmem [resolvable:$true] %s1139
          %1142 = dma.vmem_to_hbm [thread:$0]  %s1140, 128, %s1137, %s1126
        $region80: #{tpu_custom_call.1} parent=47 // pred_fallthru
          _
      $region48: #{tpu_custom_call.1} parent=5 // pred_fallthru
        _
      %p1143 = scmp.le.s32.totalorder 2, %s22
      // Predicated region
      $region81: #{tpu_custom_call.1} parent=5 // pred_check
        %p1144 = pneg %p1143
      $region82: #{tpu_custom_call.1} parent=5 // pred_check_branch
        %1146 = sbr.rel (%p1144) target = $region84
      $region83: #{tpu_custom_call.1} parent=5 // pred_region
        %s1147 = ssub.s32 %s22, 2
        // Predicated region
        $region85: #{tpu_custom_call.1} parent=83 // pred_check
          %p1148 = pneg %p203
        $region86: #{tpu_custom_call.1} parent=83 // pred_check_branch
          %1150 = sbr.rel (%p1148) target = $region88
        $region87: #{tpu_custom_call.1} parent=83 // pred_region
          %s1151 = sand.u32 %s188, 1
          %s1152 = scalar_lea.sflag [#allocation4], %s1151
          %s1153 = sand.u32 %s188, 1
          %s1154 = smul.addr %s1153, 8
          %s1155 = scalar_lea.vmem [#allocation14], %s1154
          %1156 = dma.done %s1152, 128
        $region88: #{tpu_custom_call.1} parent=83 // pred_fallthru
          _
      $region84: #{tpu_custom_call.1} parent=5 // pred_fallthru
        _
    $region6: #{tpu_custom_call.1} parent=1 // loop_footer
      %s26 = sadd.s32 1, %s22
    $region7: #{tpu_custom_call.1} parent=1 // loop_footer_branch
      %21 = sbr.rel target = $region3
    $region8: #{tpu_custom_call.1} parent=1 // loop_exit
      _
    %1157 = vsyncpa [#allocation3], 1
    %s1158 = scalar_lea.sflag [#allocation3], 1
    %1159 = vsyncpa %s1158, 1
    %1160 = vsyncpa [#allocation6], 1
    %1161 = vsyncpa [#allocation9], 1
    %1162 = vsyncpa [#allocation12], 1
    %1163 = vsyncpa [#allocation4], 1
    %s1164 = scalar_lea.sflag [#allocation4], 1
    %1165 = vsyncpa %s1164, 1

</llo_original>
